<compile_context>
chip_gen: v7x
topology: tpu7x:2x2x1
jax: 0.10.0
libtpu: 0.0.40
codegen_flags: <defaults>
</compile_context>

<pallas_src>
import functools
import math

import jax
import jax.numpy as jnp
from jax.experimental import pallas as pl
from jax.experimental.pallas import tpu as pltpu

_MIB = 1024 * 1024


# ----------------------------------------------------------------------------------
# Kernel bodies
# ----------------------------------------------------------------------------------
def _upsample_rows_kernel(x_ref, o_ref):
    """x_ref: (TR, WC) input image rows -> o_ref: (2*TR, 2*WC)."""
    y = jnp.repeat(x_ref[...], 2, axis=1)      # width duplication  (lane interleave)
    o_ref[...] = jnp.repeat(y, 2, axis=0)      # height duplication (sublane interleave)


def _upsample_packed_kernel(k, w, x_ref, o_ref):
    """Lane-dense variant for small / odd W.

    x_ref: (TG, K*W)   -- K consecutive input image rows packed per matrix row.
    o_ref: (TG, 4*K*W) -- flat row-major output for those same rows:
        [dup_w(r0), dup_w(r0), dup_w(r1), dup_w(r1), ...]
    """
    x = x_ref[...]
    tg = x.shape[0]
    seg = x.reshape(tg, k, 1, w)                                   # one segment / image row
    dup_h = jnp.broadcast_to(seg, (tg, k, 2, w)).reshape(tg, 2 * k * w)
    o_ref[...] = jnp.repeat(dup_h, 2, axis=-1)                     # dense lane interleave


# ----------------------------------------------------------------------------------
# Cost / VMEM budgeting
# ----------------------------------------------------------------------------------
def _cost(in_rows, in_cols, itemsize):
    # 1x input read + 4x output write of the input footprint.
    return pl.CostEstimate(flops=0, transcendentals=0,
                           bytes_accessed=5 * in_rows * in_cols * itemsize)


@functools.lru_cache(maxsize=None)
def _vmem_budget():
    """(vmem_limit_bytes, target output-block bytes) derived from the running chip."""
    try:
        cap = int(pltpu.get_tpu_info().vmem_capacity_bytes)
    except Exception:
        cap = 64 * _MIB                              # conservative (v7x-sized) default
    limit = min((cap * 3) // 4, 64 * _MIB)           # 48 MiB on 64-MiB chips, 64 MiB on 128-MiB
    # Per-step working set ~= 2x out + 2x in + interleave intermediates ~= 4x out block.
    target_out_block = limit // 6                    # ~8 MiB (v7x) / ~10.6 MiB (v5e/v6e)
    return limit, target_out_block


# ----------------------------------------------------------------------------------
# Block sizing
# ----------------------------------------------------------------------------------
def _round_up(v, m):
    return -(-v // m) * m


def _pick_pack(rows, w):
    """Image rows packed per matrix row so 4*K*W (stored last dim) is lane-dense."""
    if w % 64 == 0:
        return 1                                     # row path already lane-dense
    for target in (128, 64, 32):
        k = target // math.gcd(w, target)
        if k > 1 and rows % k == 0:
            return k
    return 1


def _pick_block_rows(extent, out_bytes_per_row, sub, target_block_bytes):
    """Input rows per grid step along a row axis of size `extent`."""
    if extent <= sub:
        return int(extent)                           # full extent: no divisibility rule
    vmem_rows = max(sub, (target_block_bytes // out_bytes_per_row) // sub * sub)
    steps = max(2, min(8, extent // sub))            # keep the grid multi-step (megacore)
    par_rows = max(sub, _round_up(-(-extent // steps), sub))
    tr = min(vmem_rows, par_rows)
    return int(extent if tr >= extent else tr)


def _pick_width_chunk(w, itemsize, sub, target_block_bytes):
    """Lane chunk (multiple of 128, or full W) for the row-block kernel."""
    if w <= 256 or sub * 4 * w * itemsize <= target_block_bytes:
        return int(w)
    wc = (target_block_bytes // (4 * sub * itemsize)) // 128 * 128
    return int(max(128, min(wc, w)))


# ----------------------------------------------------------------------------------
# pallas_call builders
# ----------------------------------------------------------------------------------
def _build_row_call(rows, w, dtype, tr, wc, vmem_limit):
    itemsize = jnp.dtype(dtype).itemsize
    return pl.pallas_call(
        _upsample_rows_kernel,
        out_shape=jax.ShapeDtypeStruct((2 * rows, 2 * w), dtype),
        grid=(pl.cdiv(rows, tr), pl.cdiv(w, wc)),
        in_specs=[pl.BlockSpec((tr, wc), lambda r, c: (r, c))],
        out_specs=pl.BlockSpec((2 * tr, 2 * wc), lambda r, c: (r, c)),
        compiler_params=pltpu.CompilerParams(
            dimension_semantics=("parallel", "parallel"),
            vmem_limit_bytes=vmem_limit),
        cost_estimate=_cost(rows, w, itemsize),
    )


def _build_packed_call(g, k, w, dtype, tg, vmem_limit):
    itemsize = jnp.dtype(dtype).itemsize
    l = k * w
    return pl.pallas_call(
        functools.partial(_upsample_packed_kernel, k, w),
        out_shape=jax.ShapeDtypeStruct((g, 4 * l), dtype),
        grid=(pl.cdiv(g, tg),),
        in_specs=[pl.BlockSpec((tg, l), lambda i: (i, 0))],
        out_specs=pl.BlockSpec((tg, 4 * l), lambda i: (i, 0)),
        compiler_params=pltpu.CompilerParams(
            dimension_semantics=("parallel",),
            vmem_limit_bytes=vmem_limit),
        cost_estimate=_cost(g, l, itemsize),
    )


# ----------------------------------------------------------------------------------
# Public wrapper (forward pass of the Upsample module)
# ----------------------------------------------------------------------------------
def upsample_nearest_2x(x_nchw):
    """Nearest-neighbor 2x spatial upsample of an NCHW array via a Pallas TPU kernel."""
    n, c, h, w = x_nchw.shape
    dtype = x_nchw.dtype
    itemsize = jnp.dtype(dtype).itemsize
    rows = n * c * h                                  # total input image rows
    sub = max(8, 32 // itemsize)                      # packed sublane tile: f32 8 / bf16 16 / i8 32
    vmem_limit, target_out = _vmem_budget()

    # Lane-dense packed path for small / odd W.
    k = _pick_pack(rows, w)
    if k >= 2:
        g, l = rows // k, k * w
        out_row_bytes = 4 * l * itemsize
        if min(sub, g) * out_row_bytes <= target_out:     # minimal block fits the budget
            tg = _pick_block_rows(g, out_row_bytes, sub, target_out)
            try:
                out = _build_packed_call(g, k, w, dtype, tg, vmem_limit)(
                    x_nchw.reshape(g, l))                 # free row-major view
                return out.reshape(n, c, 2 * h, 2 * w)    # free row-major reshape
            except Exception:
                pass  # best-effort (eager) safety net: fall back to the row-block kernel

    # Row-block path: lane-dense whenever 2*WC % 128 == 0; chunks the lane axis with a
    # second "parallel" grid dimension when W is too large for a single-width block.
    wc = _pick_width_chunk(w, itemsize, sub, target_out)
    tr = _pick_block_rows(rows, 4 * wc * itemsize, sub, target_out)
    out = _build_row_call(rows, w, dtype, tr, wc, vmem_limit)(x_nchw.reshape(rows, w))
    return out.reshape(n, c, 2 * h, 2 * w)


if __name__ == "__main__":
    key = jax.random.PRNGKey(0)
    x = jax.random.normal(key, (2, 4, 16, 16), dtype=jnp.float32)  # NCHW, like PyTorch

    y = jax.block_until_ready(upsample_nearest_2x(x))

    # Pure-JAX reference of F.interpolate(x, scale_factor=2, mode='nearest')
    ref = jnp.repeat(jnp.repeat(x, 2, axis=2), 2, axis=3)

    assert y.shape == (2, 4, 32, 32), y.shape
    assert y.dtype == x.dtype
    assert jnp.array_equal(y, ref), "mismatch vs nearest-upsample reference"

    print("KERNEL_OK")
</pallas_src>

<mosaic_0001>
module attributes {stable_mosaic.version = 11 : i64} {
  func.func @_upsample_packed_kernel(%arg0: i32, %arg1: memref<8x128xf32, #tpu.memory_space<vmem>>, %arg2: memref<8x512xf32, #tpu.memory_space<vmem>>) attributes {dimension_semantics = [#tpu.dimension_semantics<parallel>], iteration_bounds = array<i64: 2>, scalar_prefetch = 0 : i64, scratch_operands = 0 : i64, tpu.core_type = #tpu.core_type<tc>, window_params = [{transform_indices = @transform_0, window_bounds = array<i64: 8, 128>}, {transform_indices = @transform_1, window_bounds = array<i64: 8, 512>}]} {
    %c0 = arith.constant 0 : index
    %c0_0 = arith.constant 0 : index
    %0 = vector.load %arg1[%c0, %c0_0] : memref<8x128xf32, #tpu.memory_space<vmem>>, vector<8x128xf32>
    %1 = vector.shape_cast %0 : vector<8x128xf32> to vector<8x8x1x16xf32>
    %2 = vector.shape_cast %1 : vector<8x8x1x16xf32> to vector<8x8x1x16xf32>
    %3 = vector.broadcast %2 : vector<8x8x1x16xf32> to vector<8x8x2x16xf32>
    %4 = vector.shape_cast %3 : vector<8x8x2x16xf32> to vector<8x256xf32>
    %5 = vector.shape_cast %4 : vector<8x256xf32> to vector<8x256x1xf32>
    %6 = vector.broadcast %5 : vector<8x256x1xf32> to vector<8x256x2xf32>
    %7 = vector.shape_cast %6 : vector<8x256x2xf32> to vector<8x512xf32>
    %c0_1 = arith.constant 0 : index
    %c0_2 = arith.constant 0 : index
    %8 = vector.load %arg2[%c0_1, %c0_2] : memref<8x512xf32, #tpu.memory_space<vmem>>, vector<8x512xf32>
    tpu.vector_store %arg2[%c0_1, %c0_2], %7 {strides = array<i32>} : memref<8x512xf32, #tpu.memory_space<vmem>>, vector<8x512xf32>,
    return
  }
  func.func @transform_0(%arg0: i32) -> (i32, i32) {
    %c0_i32 = arith.constant 0 : i32
    %c0_i32_0 = arith.constant 0 : i32
    return %arg0, %c0_i32 : i32, i32
  }
  func.func @transform_1(%arg0: i32) -> (i32, i32) {
    %c0_i32 = arith.constant 0 : i32
    %c0_i32_0 = arith.constant 0 : i32
    return %arg0, %c0_i32 : i32, i32
  }
}

module attributes {stable_mosaic.version = 11 : i64} {
  func.func @_upsample_rows_kernel(%arg0: i32, %arg1: i32, %arg2: memref<16x16xf32, #tpu.memory_space<vmem>>, %arg3: memref<32x32xf32, #tpu.memory_space<vmem>>) attributes {dimension_semantics = [#tpu.dimension_semantics<parallel>, #tpu.dimension_semantics<parallel>], iteration_bounds = array<i64: 8, 1>, scalar_prefetch = 0 : i64, scratch_operands = 0 : i64, tpu.core_type = #tpu.core_type<tc>, window_params = [{transform_indices = @transform_0, window_bounds = array<i64: 16, 16>}, {transform_indices = @transform_1, window_bounds = array<i64: 32, 32>}]} {
    %c0 = arith.constant 0 : index
    %c0_0 = arith.constant 0 : index
    %0 = vector.load %arg2[%c0, %c0_0] : memref<16x16xf32, #tpu.memory_space<vmem>>, vector<16x16xf32>
    %1 = vector.shape_cast %0 : vector<16x16xf32> to vector<16x16x1xf32>
    %2 = vector.broadcast %1 : vector<16x16x1xf32> to vector<16x16x2xf32>
    %3 = vector.shape_cast %2 : vector<16x16x2xf32> to vector<16x32xf32>
    %4 = vector.shape_cast %3 : vector<16x32xf32> to vector<16x1x32xf32>
    %5 = vector.broadcast %4 : vector<16x1x32xf32> to vector<16x2x32xf32>
    %6 = vector.shape_cast %5 : vector<16x2x32xf32> to vector<32x32xf32>
    %c0_1 = arith.constant 0 : index
    %c0_2 = arith.constant 0 : index
    %7 = vector.load %arg3[%c0_1, %c0_2] : memref<32x32xf32, #tpu.memory_space<vmem>>, vector<32x32xf32>
    tpu.vector_store %arg3[%c0_1, %c0_2], %6 {strides = array<i32>} : memref<32x32xf32, #tpu.memory_space<vmem>>, vector<32x32xf32>,
    return
  }
  func.func @transform_0(%arg0: i32, %arg1: i32) -> (i32, i32) {
    %c0_i32 = arith.constant 0 : i32
    return %arg0, %arg1 : i32, i32
  }
  func.func @transform_1(%arg0: i32, %arg1: i32) -> (i32, i32) {
    %c0_i32 = arith.constant 0 : i32
    return %arg0, %arg1 : i32, i32
  }
}

</mosaic_0001>

<llo_original>
// kernel: tpu_custom_call.1
$region0: #{tpu_custom_call.1}
  #allocation0 [shape = 'u32[]', space=smem, size = 0x4, offset = 0x4, fixed_abs, tag = 'smem constant byte address 0x4 - core index']
  #allocation1 [shape = 'u32[144,128]{1,0:T(1,128)}', space=vmem, size = 0x12000, scoped, tag = 'internal scratch']
  %s0 = inlined_call_operand.vmem [shape: f32[128,16], index: 0, kind: input, shape index: {}]
  %s1 = inlined_call_operand.vmem [shape: f32[256,32], index: 1, kind: output, shape index: {}]
  %s2 = sld [smem:[#allocation0]]
  $region37: #{tpu_custom_call.1} parent=0
    _
  %s4 = ssub.s32 1, %s2
  %s5 = scalar_select 0, %s4, %s2
  loop: start=0, step=1, limit=10
  $region2: #{tpu_custom_call.1} parent=0 // loop_pre_header
    _
  $region3: #{tpu_custom_call.1} parent=0 // loop_header
    %s7 = sphi 0, %s11
    %p8 = scmp.ge.s32.totalorder %s7, 10
    %s14 = sphi 0, %s26
    %s15 = sphi 0, %s22
    %s16 = sphi 0, %s14
    %s17 = sphi 0, %s15
    %s18 = sphi 0, %s16
    %s19 = sphi 0, %s17
    %s31 = sphi 0, %s33
    %s34 = sphi 0, %s31
    %s35 = sphi 0, %s34
    %s51 = sphi 0, %s35
    %s59 = sphi 0, %s61
    %s62 = sphi 0, %s59
    %s63 = sphi 0, %s62
    %s79 = sphi 0, %s63
  $region4: #{tpu_custom_call.1} parent=0 // loop_header_branch
    %10 = sbr.rel (%p8) target = $region8
  $region5: #{tpu_custom_call.1} parent=0 // loop_body
    %s12 = ssub.s32 %s7, 1
    %s13 = ssub.s32 %s7, 2
    %s20 = sadd.s32 1, %s15
    %p21 = scmp.ge.s32.totalorder %s20, 1
    %s22 = scalar_select %p21, 0, %s20
    %s23 = sadd.s32 1, %s14
    %s24 = scalar_select %p21, %s23, %s14
    %p25 = scmp.ge.s32.totalorder %s24, 8
    %s26 = scalar_select %p25, 0, %s24
    %s27 = ssub.s32 %s14, %s26
    %s28 = ssub.s32 %s15, %s22
    %s29 = sor.u32 %s27, %s28
    %p30 = scmp.eq.s32.totalorder %s29, 0
    %s32 = sadd.s32 %s31, 1
    %s33 = scalar_select %p30, %s31, %s32
    %p36 = pneg %p30
    %p37 = scmp.eq.s32.totalorder %s7, 7
    %p38 = por %p36, %p37
    %p39 = scmp.ne.s32.totalorder %s31, %s34
    %p40 = scmp.eq.s32.totalorder %s7, 0
    %p41 = por %p39, %p40
    %p42 = scmp.ne.s32.totalorder %s31, %s34
    %p43 = scmp.eq.s32.totalorder %s12, 7
    %p44 = por %p42, %p43
    %p45 = scmp.ne.s32.totalorder %s34, %s35
    %p46 = scmp.eq.s32.totalorder %s12, 0
    %p47 = por %p45, %p46
    %p48 = scmp.ne.s32.totalorder %s34, %s35
    %p49 = scmp.eq.s32.totalorder %s13, 7
    %p50 = por %p48, %p49
    %p52 = scmp.ne.s32.totalorder %s35, %s51
    %p53 = scmp.eq.s32.totalorder %s13, 0
    %p54 = por %p52, %p53
    %s55 = ssub.s32 %s14, %s26
    %s56 = ssub.s32 %s15, %s22
    %s57 = sor.u32 %s55, %s56
    %p58 = scmp.eq.s32.totalorder %s57, 0
    %s60 = sadd.s32 %s59, 1
    %s61 = scalar_select %p58, %s59, %s60
    %p64 = pneg %p58
    %p65 = scmp.eq.s32.totalorder %s7, 7
    %p66 = por %p64, %p65
    %p67 = scmp.ne.s32.totalorder %s59, %s62
    %p68 = scmp.eq.s32.totalorder %s7, 0
    %p69 = por %p67, %p68
    %p70 = scmp.ne.s32.totalorder %s59, %s62
    %p71 = scmp.eq.s32.totalorder %s12, 7
    %p72 = por %p70, %p71
    %p73 = scmp.ne.s32.totalorder %s62, %s63
    %p74 = scmp.eq.s32.totalorder %s12, 0
    %p75 = por %p73, %p74
    %p76 = scmp.ne.s32.totalorder %s62, %s63
    %p77 = scmp.eq.s32.totalorder %s13, 7
    %p78 = por %p76, %p77
    %p80 = scmp.ne.s32.totalorder %s63, %s79
    %p81 = scmp.eq.s32.totalorder %s13, 0
    %p82 = por %p80, %p81
    %p83 = scmp.le.s32.totalorder 1, %s7
    %p84 = scmp.lt.s32.totalorder %s7, 9
    %p85 = pnand %p83, %p84
    %p86 = pneg %p85
    // Predicated region
    $region9: #{tpu_custom_call.1} parent=5 // pred_check
      _
    $region10: #{tpu_custom_call.1} parent=5 // pred_check_branch
      %88 = sbr.rel (%p85) target = $region12
    $region11: #{tpu_custom_call.1} parent=5 // pred_region
      %s89 = ssub.s32 %s7, 1
    $region12: #{tpu_custom_call.1} parent=5 // pred_fallthru
      _
    %p90 = scmp.lt.s32.totalorder %s7, 8
    // Predicated region
    $region13: #{tpu_custom_call.1} parent=5 // pred_check
      %p91 = pneg %p90
    $region14: #{tpu_custom_call.1} parent=5 // pred_check_branch
      %93 = sbr.rel (%p91) target = $region16
    $region15: #{tpu_custom_call.1} parent=5 // pred_region
      // Predicated region
      $region17: #{tpu_custom_call.1} parent=15 // pred_check
        %p94 = pneg %p41
      $region18: #{tpu_custom_call.1} parent=15 // pred_check_branch
        %96 = sbr.rel (%p94) target = $region20
      $region19: #{tpu_custom_call.1} parent=15 // pred_region
        %s97 = smul.u32 2, %s14
        %p98 = scmp.lt.s32.totalorder %s97, 15
        %s99 = scalar_select %p98, %s97, 15
        %p100 = scmp.lt.s32.totalorder %s15, 0
        %s101 = scalar_select %p100, %s15, 0
        %s102 = sadd.s32 %s101, %s99
        %s103 = smul.addr %s102, 8
        %s104 = scalar_lea.vmem %s0, %s103
        %s105 = smul.u32 2, %s14
      $region20: #{tpu_custom_call.1} parent=15 // pred_fallthru
        _
    $region16: #{tpu_custom_call.1} parent=5 // pred_fallthru
      _
    %p106 = scmp.le.s32.totalorder 1, %s7
    %p107 = scmp.lt.s32.totalorder %s7, 9
    %p108 = pnand %p106, %p107
    %p109 = pneg %p108
    // Predicated region
    $region21: #{tpu_custom_call.1} parent=5 // pred_check
      _
    $region22: #{tpu_custom_call.1} parent=5 // pred_check_branch
      %111 = sbr.rel (%p108) target = $region24
    $region23: #{tpu_custom_call.1} parent=5 // pred_region
      %s112 = ssub.s32 %s7, 1
      %s113 = smul.u32 2, %s16
      %p114 = scmp.lt.s32.totalorder %s113, 15
      %s115 = scalar_select %p114, %s113, 15
      %p116 = scmp.lt.s32.totalorder %s17, 0
      %s117 = scalar_select %p116, %s17, 0
      %s118 = sadd.s32 %s117, %s115
      %s119 = smul.addr %s118, 8
      %s120 = scalar_lea.vmem %s0, %s119
      %p121 = pneg %p47
      %p122 = pneg %p44
      %p123 = pneg %p75
      %p124 = pneg %p72
      %s125 = smul.u32 4, %s16
      %p126 = scmp.lt.s32.totalorder %s125, 31
      %s127 = scalar_select %p126, %s125, 31
      %p128 = scmp.lt.s32.totalorder %s17, 0
      %s129 = scalar_select %p128, %s17, 0
      %s130 = sadd.s32 %s129, %s127
      %s131 = smul.addr %s130, 8
      %s132 = scalar_lea.vmem %s1, %s131
      %s133 = smul.u32 2, %s16
      %p134 = scmp.lt.s32.totalorder %s133, 15
      %s135 = scalar_select %p134, %s133, 15
      %p136 = scmp.lt.s32.totalorder %s17, 0
      %s137 = scalar_select %p136, %s17, 0
      %s138 = sadd.s32 %s137, %s135
      %s139 = smul.addr %s138, 8
      %s140 = scalar_lea.vmem %s0, %s139
      %s141 = smul.u32 2, %s16
      %s142 = smul.u32 4, %s16
      %p143 = scmp.lt.s32.totalorder %s142, 31
      %s144 = scalar_select %p143, %s142, 31
      %p145 = scmp.lt.s32.totalorder %s17, 0
      %s146 = scalar_select %p145, %s17, 0
      %s147 = sadd.s32 %s146, %s144
      %s148 = smul.addr %s147, 8
      %s149 = scalar_lea.vmem %s1, %s148
      %s150 = smul.u32 4, %s16
      %v151 = vld [vmem:[%s140] sm:$0xff]
      %v152 = vld [vmem:[%s140 + $0x8] sm:$0xff]
      %v153 = vlaneseq
      %v154 = vshrl.u32 %v153, 7
      %v155 = vsub.s32 0, %v154
      %v156 = vrot.slane %v151, %v155
      %158 = vbcast.lane.b32.xlu0 %v156, 256
      %v159 = vpop.permute.xlu0 %158
      %s161 = sor.u32 256, 8
      %162 = vbcast.lane.b32.xlu0 %v156, %s161
      %v163 = vpop.permute.xlu0 %162
      %v164 = vlaneseq
      %v165 = vshrl.u32 %v164, 7
      %v166 = vsub.s32 1, %v165
      %v167 = vrot.slane %v151, %v166
      %169 = vbcast.lane.b32.xlu0 %v167, 256
      %v170 = vpop.permute.xlu0 %169
      %s172 = sor.u32 256, 8
      %173 = vbcast.lane.b32.xlu0 %v167, %s172
      %v174 = vpop.permute.xlu0 %173
      %v175 = vlaneseq
      %v176 = vshrl.u32 %v175, 7
      %v177 = vsub.s32 2, %v176
      %v178 = vrot.slane %v151, %v177
      %180 = vbcast.lane.b32.xlu0 %v178, 256
      %v181 = vpop.permute.xlu0 %180
      %s183 = sor.u32 256, 8
      %184 = vbcast.lane.b32.xlu0 %v178, %s183
      %v185 = vpop.permute.xlu0 %184
      %v186 = vlaneseq
      %v187 = vshrl.u32 %v186, 7
      %v188 = vsub.s32 3, %v187
      %v189 = vrot.slane %v151, %v188
      %191 = vbcast.lane.b32.xlu0 %v189, 256
      %v192 = vpop.permute.xlu0 %191
      %s194 = sor.u32 256, 8
      %195 = vbcast.lane.b32.xlu0 %v189, %s194
      %v196 = vpop.permute.xlu0 %195
      %v197 = vlaneseq
      %v198 = vshrl.u32 %v197, 7
      %v199 = vsub.s32 4, %v198
      %v200 = vrot.slane %v151, %v199
      %202 = vbcast.lane.b32.xlu0 %v200, 256
      %v203 = vpop.permute.xlu0 %202
      %s205 = sor.u32 256, 8
      %206 = vbcast.lane.b32.xlu0 %v200, %s205
      %v207 = vpop.permute.xlu0 %206
      %v208 = vlaneseq
      %v209 = vshrl.u32 %v208, 7
      %v210 = vsub.s32 5, %v209
      %v211 = vrot.slane %v151, %v210
      %213 = vbcast.lane.b32.xlu0 %v211, 256
      %v214 = vpop.permute.xlu0 %213
      %s216 = sor.u32 256, 8
      %217 = vbcast.lane.b32.xlu0 %v211, %s216
      %v218 = vpop.permute.xlu0 %217
      %v219 = vlaneseq
      %v220 = vshrl.u32 %v219, 7
      %v221 = vsub.s32 6, %v220
      %v222 = vrot.slane %v151, %v221
      %224 = vbcast.lane.b32.xlu0 %v222, 256
      %v225 = vpop.permute.xlu0 %224
      %s227 = sor.u32 256, 8
      %228 = vbcast.lane.b32.xlu0 %v222, %s227
      %v229 = vpop.permute.xlu0 %228
      %v230 = vlaneseq
      %v231 = vshrl.u32 %v230, 7
      %v232 = vsub.s32 7, %v231
      %v233 = vrot.slane %v151, %v232
      %235 = vbcast.lane.b32.xlu0 %v233, 256
      %v236 = vpop.permute.xlu0 %235
      %s238 = sor.u32 256, 8
      %239 = vbcast.lane.b32.xlu0 %v233, %s238
      %v240 = vpop.permute.xlu0 %239
      %v241 = vlaneseq
      %v242 = vshrl.u32 %v241, 7
      %v243 = vsub.s32 0, %v242
      %v244 = vrot.slane %v152, %v243
      %246 = vbcast.lane.b32.xlu0 %v244, 256
      %v247 = vpop.permute.xlu0 %246
      %s249 = sor.u32 256, 8
      %250 = vbcast.lane.b32.xlu0 %v244, %s249
      %v251 = vpop.permute.xlu0 %250
      %v252 = vlaneseq
      %v253 = vshrl.u32 %v252, 7
      %v254 = vsub.s32 1, %v253
      %v255 = vrot.slane %v152, %v254
      %257 = vbcast.lane.b32.xlu0 %v255, 256
      %v258 = vpop.permute.xlu0 %257
      %s260 = sor.u32 256, 8
      %261 = vbcast.lane.b32.xlu0 %v255, %s260
      %v262 = vpop.permute.xlu0 %261
      %v263 = vlaneseq
      %v264 = vshrl.u32 %v263, 7
      %v265 = vsub.s32 2, %v264
      %v266 = vrot.slane %v152, %v265
      %268 = vbcast.lane.b32.xlu0 %v266, 256
      %v269 = vpop.permute.xlu0 %268
      %s271 = sor.u32 256, 8
      %272 = vbcast.lane.b32.xlu0 %v266, %s271
      %v273 = vpop.permute.xlu0 %272
      %v274 = vlaneseq
      %v275 = vshrl.u32 %v274, 7
      %v276 = vsub.s32 3, %v275
      %v277 = vrot.slane %v152, %v276
      %279 = vbcast.lane.b32.xlu0 %v277, 256
      %v280 = vpop.permute.xlu0 %279
      %s282 = sor.u32 256, 8
      %283 = vbcast.lane.b32.xlu0 %v277, %s282
      %v284 = vpop.permute.xlu0 %283
      %v285 = vlaneseq
      %v286 = vshrl.u32 %v285, 7
      %v287 = vsub.s32 4, %v286
      %v288 = vrot.slane %v152, %v287
      %290 = vbcast.lane.b32.xlu0 %v288, 256
      %v291 = vpop.permute.xlu0 %290
      %s293 = sor.u32 256, 8
      %294 = vbcast.lane.b32.xlu0 %v288, %s293
      %v295 = vpop.permute.xlu0 %294
      %v296 = vlaneseq
      %v297 = vshrl.u32 %v296, 7
      %v298 = vsub.s32 5, %v297
      %v299 = vrot.slane %v152, %v298
      %301 = vbcast.lane.b32.xlu0 %v299, 256
      %v302 = vpop.permute.xlu0 %301
      %s304 = sor.u32 256, 8
      %305 = vbcast.lane.b32.xlu0 %v299, %s304
      %v306 = vpop.permute.xlu0 %305
      %v307 = vlaneseq
      %v308 = vshrl.u32 %v307, 7
      %v309 = vsub.s32 6, %v308
      %v310 = vrot.slane %v152, %v309
      %312 = vbcast.lane.b32.xlu0 %v310, 256
      %v313 = vpop.permute.xlu0 %312
      %s315 = sor.u32 256, 8
      %316 = vbcast.lane.b32.xlu0 %v310, %s315
      %v317 = vpop.permute.xlu0 %316
      %v318 = vlaneseq
      %v319 = vshrl.u32 %v318, 7
      %v320 = vsub.s32 7, %v319
      %v321 = vrot.slane %v152, %v320
      %323 = vbcast.lane.b32.xlu0 %v321, 256
      %v324 = vpop.permute.xlu0 %323
      %s326 = sor.u32 256, 8
      %327 = vbcast.lane.b32.xlu0 %v321, %s326
      %v328 = vpop.permute.xlu0 %327
      %v329 = vcombine.high %v159, 0.0
      %v331 = vunpack.c.l.s4 1983009808
      %v332 = vunpack.c.0.s8 %v331
      %v333 = vlaneseq
      %v334 = vshrl.u32 %v333, 7
      %v335 = vsub.s32 %v332, %v334
      %v336 = vrot.slane %v159, %v335
      %v338 = vunpack.c.l.s4 1983009808
      %v339 = vunpack.c.0.s8 %v338
      %v340 = vlaneseq
      %v341 = vshrl.u32 %v340, 7
      %v342 = vsub.s32 %v339, %v341
      %v343 = vrot.slane %v329, %v342
      %v344 = vcombine.high %v336, 0.0
      %v346 = vunpack.c.l.s4 1934713408
      %v347 = vunpack.c.0.s8 %v346
      %v348 = vlaneseq
      %v349 = vshrl.u32 %v348, 7
      %v350 = vsub.s32 %v347, %v349
      %v351 = vrot.slane %v336, %v350
      %v353 = vunpack.c.l.s4 1934713408
      %v354 = vunpack.c.0.s8 %v353
      %v355 = vlaneseq
      %v356 = vshrl.u32 %v355, 7
      %v357 = vsub.s32 %v354, %v356
      %v358 = vrot.slane %v344, %v357
      %v359 = vcombine.high %v343, 0.0
      %v361 = vunpack.c.l.s4 1934713408
      %v362 = vunpack.c.0.s8 %v361
      %v363 = vlaneseq
      %v364 = vshrl.u32 %v363, 7
      %v365 = vsub.s32 %v362, %v364
      %v366 = vrot.slane %v343, %v365
      %v368 = vunpack.c.l.s4 1934713408
      %v369 = vunpack.c.0.s8 %v368
      %v370 = vlaneseq
      %v371 = vshrl.u32 %v370, 7
      %v372 = vsub.s32 %v369, %v371
      %v373 = vrot.slane %v359, %v372
      %v374 = vcombine.high %v351, 0.0
      %v375 = vcombine.high %v358, 0.0
      %v376 = vcombine.high %v366, 0.0
      %v377 = vcombine.high %v373, 0.0
      %v378 = vcombine.high %v163, 0.0
      %v380 = vunpack.c.l.s4 1983009808
      %v381 = vunpack.c.0.s8 %v380
      %v382 = vlaneseq
      %v383 = vshrl.u32 %v382, 7
      %v384 = vsub.s32 %v381, %v383
      %v385 = vrot.slane %v163, %v384
      %v387 = vunpack.c.l.s4 1983009808
      %v388 = vunpack.c.0.s8 %v387
      %v389 = vlaneseq
      %v390 = vshrl.u32 %v389, 7
      %v391 = vsub.s32 %v388, %v390
      %v392 = vrot.slane %v378, %v391
      %v393 = vcombine.high %v385, 0.0
      %v395 = vunpack.c.l.s4 1934713408
      %v396 = vunpack.c.0.s8 %v395
      %v397 = vlaneseq
      %v398 = vshrl.u32 %v397, 7
      %v399 = vsub.s32 %v396, %v398
      %v400 = vrot.slane %v385, %v399
      %v402 = vunpack.c.l.s4 1934713408
      %v403 = vunpack.c.0.s8 %v402
      %v404 = vlaneseq
      %v405 = vshrl.u32 %v404, 7
      %v406 = vsub.s32 %v403, %v405
      %v407 = vrot.slane %v393, %v406
      %v408 = vcombine.high %v392, 0.0
      %v410 = vunpack.c.l.s4 1934713408
      %v411 = vunpack.c.0.s8 %v410
      %v412 = vlaneseq
      %v413 = vshrl.u32 %v412, 7
      %v414 = vsub.s32 %v411, %v413
      %v415 = vrot.slane %v392, %v414
      %v417 = vunpack.c.l.s4 1934713408
      %v418 = vunpack.c.0.s8 %v417
      %v419 = vlaneseq
      %v420 = vshrl.u32 %v419, 7
      %v421 = vsub.s32 %v418, %v420
      %v422 = vrot.slane %v408, %v421
      %v423 = vcombine.high %v400, 0.0
      %v424 = vcombine.high %v407, 0.0
      %v425 = vcombine.high %v415, 0.0
      %v426 = vcombine.high %v422, 0.0
      %v427 = vcombine.high %v170, 0.0
      %v429 = vunpack.c.l.s4 1983009808
      %v430 = vunpack.c.0.s8 %v429
      %v431 = vlaneseq
      %v432 = vshrl.u32 %v431, 7
      %v433 = vsub.s32 %v430, %v432
      %v434 = vrot.slane %v170, %v433
      %v436 = vunpack.c.l.s4 1983009808
      %v437 = vunpack.c.0.s8 %v436
      %v438 = vlaneseq
      %v439 = vshrl.u32 %v438, 7
      %v440 = vsub.s32 %v437, %v439
      %v441 = vrot.slane %v427, %v440
      %v442 = vcombine.high %v434, 0.0
      %v444 = vunpack.c.l.s4 1934713408
      %v445 = vunpack.c.0.s8 %v444
      %v446 = vlaneseq
      %v447 = vshrl.u32 %v446, 7
      %v448 = vsub.s32 %v445, %v447
      %v449 = vrot.slane %v434, %v448
      %v451 = vunpack.c.l.s4 1934713408
      %v452 = vunpack.c.0.s8 %v451
      %v453 = vlaneseq
      %v454 = vshrl.u32 %v453, 7
      %v455 = vsub.s32 %v452, %v454
      %v456 = vrot.slane %v442, %v455
      %v457 = vcombine.high %v441, 0.0
      %v459 = vunpack.c.l.s4 1934713408
      %v460 = vunpack.c.0.s8 %v459
      %v461 = vlaneseq
      %v462 = vshrl.u32 %v461, 7
      %v463 = vsub.s32 %v460, %v462
      %v464 = vrot.slane %v441, %v463
      %v466 = vunpack.c.l.s4 1934713408
      %v467 = vunpack.c.0.s8 %v466
      %v468 = vlaneseq
      %v469 = vshrl.u32 %v468, 7
      %v470 = vsub.s32 %v467, %v469
      %v471 = vrot.slane %v457, %v470
      %v472 = vcombine.high %v449, 0.0
      %v473 = vcombine.high %v456, 0.0
      %v474 = vcombine.high %v464, 0.0
      %v475 = vcombine.high %v471, 0.0
      %v476 = vcombine.high %v174, 0.0
      %v478 = vunpack.c.l.s4 1983009808
      %v479 = vunpack.c.0.s8 %v478
      %v480 = vlaneseq
      %v481 = vshrl.u32 %v480, 7
      %v482 = vsub.s32 %v479, %v481
      %v483 = vrot.slane %v174, %v482
      %v485 = vunpack.c.l.s4 1983009808
      %v486 = vunpack.c.0.s8 %v485
      %v487 = vlaneseq
      %v488 = vshrl.u32 %v487, 7
      %v489 = vsub.s32 %v486, %v488
      %v490 = vrot.slane %v476, %v489
      %v491 = vcombine.high %v483, 0.0
      %v493 = vunpack.c.l.s4 1934713408
      %v494 = vunpack.c.0.s8 %v493
      %v495 = vlaneseq
      %v496 = vshrl.u32 %v495, 7
      %v497 = vsub.s32 %v494, %v496
      %v498 = vrot.slane %v483, %v497
      %v500 = vunpack.c.l.s4 1934713408
      %v501 = vunpack.c.0.s8 %v500
      %v502 = vlaneseq
      %v503 = vshrl.u32 %v502, 7
      %v504 = vsub.s32 %v501, %v503
      %v505 = vrot.slane %v491, %v504
      %v506 = vcombine.high %v490, 0.0
      %v508 = vunpack.c.l.s4 1934713408
      %v509 = vunpack.c.0.s8 %v508
      %v510 = vlaneseq
      %v511 = vshrl.u32 %v510, 7
      %v512 = vsub.s32 %v509, %v511
      %v513 = vrot.slane %v490, %v512
      %v515 = vunpack.c.l.s4 1934713408
      %v516 = vunpack.c.0.s8 %v515
      %v517 = vlaneseq
      %v518 = vshrl.u32 %v517, 7
      %v519 = vsub.s32 %v516, %v518
      %v520 = vrot.slane %v506, %v519
      %v521 = vcombine.high %v498, 0.0
      %v522 = vcombine.high %v505, 0.0
      %v523 = vcombine.high %v513, 0.0
      %v524 = vcombine.high %v520, 0.0
      %v525 = vcombine.high %v181, 0.0
      %v527 = vunpack.c.l.s4 1983009808
      %v528 = vunpack.c.0.s8 %v527
      %v529 = vlaneseq
      %v530 = vshrl.u32 %v529, 7
      %v531 = vsub.s32 %v528, %v530
      %v532 = vrot.slane %v181, %v531
      %v534 = vunpack.c.l.s4 1983009808
      %v535 = vunpack.c.0.s8 %v534
      %v536 = vlaneseq
      %v537 = vshrl.u32 %v536, 7
      %v538 = vsub.s32 %v535, %v537
      %v539 = vrot.slane %v525, %v538
      %v540 = vcombine.high %v532, 0.0
      %v542 = vunpack.c.l.s4 1934713408
      %v543 = vunpack.c.0.s8 %v542
      %v544 = vlaneseq
      %v545 = vshrl.u32 %v544, 7
      %v546 = vsub.s32 %v543, %v545
      %v547 = vrot.slane %v532, %v546
      %v549 = vunpack.c.l.s4 1934713408
      %v550 = vunpack.c.0.s8 %v549
      %v551 = vlaneseq
      %v552 = vshrl.u32 %v551, 7
      %v553 = vsub.s32 %v550, %v552
      %v554 = vrot.slane %v540, %v553
      %v555 = vcombine.high %v539, 0.0
      %v557 = vunpack.c.l.s4 1934713408
      %v558 = vunpack.c.0.s8 %v557
      %v559 = vlaneseq
      %v560 = vshrl.u32 %v559, 7
      %v561 = vsub.s32 %v558, %v560
      %v562 = vrot.slane %v539, %v561
      %v564 = vunpack.c.l.s4 1934713408
      %v565 = vunpack.c.0.s8 %v564
      %v566 = vlaneseq
      %v567 = vshrl.u32 %v566, 7
      %v568 = vsub.s32 %v565, %v567
      %v569 = vrot.slane %v555, %v568
      %v570 = vcombine.high %v547, 0.0
      %v571 = vcombine.high %v554, 0.0
      %v572 = vcombine.high %v562, 0.0
      %v573 = vcombine.high %v569, 0.0
      %v574 = vcombine.high %v185, 0.0
      %v576 = vunpack.c.l.s4 1983009808
      %v577 = vunpack.c.0.s8 %v576
      %v578 = vlaneseq
      %v579 = vshrl.u32 %v578, 7
      %v580 = vsub.s32 %v577, %v579
      %v581 = vrot.slane %v185, %v580
      %v583 = vunpack.c.l.s4 1983009808
      %v584 = vunpack.c.0.s8 %v583
      %v585 = vlaneseq
      %v586 = vshrl.u32 %v585, 7
      %v587 = vsub.s32 %v584, %v586
      %v588 = vrot.slane %v574, %v587
      %v589 = vcombine.high %v581, 0.0
      %v591 = vunpack.c.l.s4 1934713408
      %v592 = vunpack.c.0.s8 %v591
      %v593 = vlaneseq
      %v594 = vshrl.u32 %v593, 7
      %v595 = vsub.s32 %v592, %v594
      %v596 = vrot.slane %v581, %v595
      %v598 = vunpack.c.l.s4 1934713408
      %v599 = vunpack.c.0.s8 %v598
      %v600 = vlaneseq
      %v601 = vshrl.u32 %v600, 7
      %v602 = vsub.s32 %v599, %v601
      %v603 = vrot.slane %v589, %v602
      %v604 = vcombine.high %v588, 0.0
      %v606 = vunpack.c.l.s4 1934713408
      %v607 = vunpack.c.0.s8 %v606
      %v608 = vlaneseq
      %v609 = vshrl.u32 %v608, 7
      %v610 = vsub.s32 %v607, %v609
      %v611 = vrot.slane %v588, %v610
      %v613 = vunpack.c.l.s4 1934713408
      %v614 = vunpack.c.0.s8 %v613
      %v615 = vlaneseq
      %v616 = vshrl.u32 %v615, 7
      %v617 = vsub.s32 %v614, %v616
      %v618 = vrot.slane %v604, %v617
      %v619 = vcombine.high %v596, 0.0
      %v620 = vcombine.high %v603, 0.0
      %v621 = vcombine.high %v611, 0.0
      %v622 = vcombine.high %v618, 0.0
      %v623 = vcombine.high %v192, 0.0
      %v625 = vunpack.c.l.s4 1983009808
      %v626 = vunpack.c.0.s8 %v625
      %v627 = vlaneseq
      %v628 = vshrl.u32 %v627, 7
      %v629 = vsub.s32 %v626, %v628
      %v630 = vrot.slane %v192, %v629
      %v632 = vunpack.c.l.s4 1983009808
      %v633 = vunpack.c.0.s8 %v632
      %v634 = vlaneseq
      %v635 = vshrl.u32 %v634, 7
      %v636 = vsub.s32 %v633, %v635
      %v637 = vrot.slane %v623, %v636
      %v638 = vcombine.high %v630, 0.0
      %v640 = vunpack.c.l.s4 1934713408
      %v641 = vunpack.c.0.s8 %v640
      %v642 = vlaneseq
      %v643 = vshrl.u32 %v642, 7
      %v644 = vsub.s32 %v641, %v643
      %v645 = vrot.slane %v630, %v644
      %v647 = vunpack.c.l.s4 1934713408
      %v648 = vunpack.c.0.s8 %v647
      %v649 = vlaneseq
      %v650 = vshrl.u32 %v649, 7
      %v651 = vsub.s32 %v648, %v650
      %v652 = vrot.slane %v638, %v651
      %v653 = vcombine.high %v637, 0.0
      %v655 = vunpack.c.l.s4 1934713408
      %v656 = vunpack.c.0.s8 %v655
      %v657 = vlaneseq
      %v658 = vshrl.u32 %v657, 7
      %v659 = vsub.s32 %v656, %v658
      %v660 = vrot.slane %v637, %v659
      %v662 = vunpack.c.l.s4 1934713408
      %v663 = vunpack.c.0.s8 %v662
      %v664 = vlaneseq
      %v665 = vshrl.u32 %v664, 7
      %v666 = vsub.s32 %v663, %v665
      %v667 = vrot.slane %v653, %v666
      %v668 = vcombine.high %v645, 0.0
      %v669 = vcombine.high %v652, 0.0
      %v670 = vcombine.high %v660, 0.0
      %v671 = vcombine.high %v667, 0.0
      %v672 = vcombine.high %v196, 0.0
      %v674 = vunpack.c.l.s4 1983009808
      %v675 = vunpack.c.0.s8 %v674
      %v676 = vlaneseq
      %v677 = vshrl.u32 %v676, 7
      %v678 = vsub.s32 %v675, %v677
      %v679 = vrot.slane %v196, %v678
      %v681 = vunpack.c.l.s4 1983009808
      %v682 = vunpack.c.0.s8 %v681
      %v683 = vlaneseq
      %v684 = vshrl.u32 %v683, 7
      %v685 = vsub.s32 %v682, %v684
      %v686 = vrot.slane %v672, %v685
      %v687 = vcombine.high %v679, 0.0
      %v689 = vunpack.c.l.s4 1934713408
      %v690 = vunpack.c.0.s8 %v689
      %v691 = vlaneseq
      %v692 = vshrl.u32 %v691, 7
      %v693 = vsub.s32 %v690, %v692
      %v694 = vrot.slane %v679, %v693
      %v696 = vunpack.c.l.s4 1934713408
      %v697 = vunpack.c.0.s8 %v696
      %v698 = vlaneseq
      %v699 = vshrl.u32 %v698, 7
      %v700 = vsub.s32 %v697, %v699
      %v701 = vrot.slane %v687, %v700
      %v702 = vcombine.high %v686, 0.0
      %v704 = vunpack.c.l.s4 1934713408
      %v705 = vunpack.c.0.s8 %v704
      %v706 = vlaneseq
      %v707 = vshrl.u32 %v706, 7
      %v708 = vsub.s32 %v705, %v707
      %v709 = vrot.slane %v686, %v708
      %v711 = vunpack.c.l.s4 1934713408
      %v712 = vunpack.c.0.s8 %v711
      %v713 = vlaneseq
      %v714 = vshrl.u32 %v713, 7
      %v715 = vsub.s32 %v712, %v714
      %v716 = vrot.slane %v702, %v715
      %v717 = vcombine.high %v694, 0.0
      %v718 = vcombine.high %v701, 0.0
      %v719 = vcombine.high %v709, 0.0
      %v720 = vcombine.high %v716, 0.0
      %v721 = vcombine.high %v203, 0.0
      %v723 = vunpack.c.l.s4 1983009808
      %v724 = vunpack.c.0.s8 %v723
      %v725 = vlaneseq
      %v726 = vshrl.u32 %v725, 7
      %v727 = vsub.s32 %v724, %v726
      %v728 = vrot.slane %v203, %v727
      %v730 = vunpack.c.l.s4 1983009808
      %v731 = vunpack.c.0.s8 %v730
      %v732 = vlaneseq
      %v733 = vshrl.u32 %v732, 7
      %v734 = vsub.s32 %v731, %v733
      %v735 = vrot.slane %v721, %v734
      %v736 = vcombine.high %v728, 0.0
      %v738 = vunpack.c.l.s4 1934713408
      %v739 = vunpack.c.0.s8 %v738
      %v740 = vlaneseq
      %v741 = vshrl.u32 %v740, 7
      %v742 = vsub.s32 %v739, %v741
      %v743 = vrot.slane %v728, %v742
      %v745 = vunpack.c.l.s4 1934713408
      %v746 = vunpack.c.0.s8 %v745
      %v747 = vlaneseq
      %v748 = vshrl.u32 %v747, 7
      %v749 = vsub.s32 %v746, %v748
      %v750 = vrot.slane %v736, %v749
      %v751 = vcombine.high %v735, 0.0
      %v753 = vunpack.c.l.s4 1934713408
      %v754 = vunpack.c.0.s8 %v753
      %v755 = vlaneseq
      %v756 = vshrl.u32 %v755, 7
      %v757 = vsub.s32 %v754, %v756
      %v758 = vrot.slane %v735, %v757
      %v760 = vunpack.c.l.s4 1934713408
      %v761 = vunpack.c.0.s8 %v760
      %v762 = vlaneseq
      %v763 = vshrl.u32 %v762, 7
      %v764 = vsub.s32 %v761, %v763
      %v765 = vrot.slane %v751, %v764
      %v766 = vcombine.high %v743, 0.0
      %v767 = vcombine.high %v750, 0.0
      %v768 = vcombine.high %v758, 0.0
      %v769 = vcombine.high %v765, 0.0
      %v770 = vcombine.high %v207, 0.0
      %v772 = vunpack.c.l.s4 1983009808
      %v773 = vunpack.c.0.s8 %v772
      %v774 = vlaneseq
      %v775 = vshrl.u32 %v774, 7
      %v776 = vsub.s32 %v773, %v775
      %v777 = vrot.slane %v207, %v776
      %v779 = vunpack.c.l.s4 1983009808
      %v780 = vunpack.c.0.s8 %v779
      %v781 = vlaneseq
      %v782 = vshrl.u32 %v781, 7
      %v783 = vsub.s32 %v780, %v782
      %v784 = vrot.slane %v770, %v783
      %v785 = vcombine.high %v777, 0.0
      %v787 = vunpack.c.l.s4 1934713408
      %v788 = vunpack.c.0.s8 %v787
      %v789 = vlaneseq
      %v790 = vshrl.u32 %v789, 7
      %v791 = vsub.s32 %v788, %v790
      %v792 = vrot.slane %v777, %v791
      %v794 = vunpack.c.l.s4 1934713408
      %v795 = vunpack.c.0.s8 %v794
      %v796 = vlaneseq
      %v797 = vshrl.u32 %v796, 7
      %v798 = vsub.s32 %v795, %v797
      %v799 = vrot.slane %v785, %v798
      %v800 = vcombine.high %v784, 0.0
      %v802 = vunpack.c.l.s4 1934713408
      %v803 = vunpack.c.0.s8 %v802
      %v804 = vlaneseq
      %v805 = vshrl.u32 %v804, 7
      %v806 = vsub.s32 %v803, %v805
      %v807 = vrot.slane %v784, %v806
      %v809 = vunpack.c.l.s4 1934713408
      %v810 = vunpack.c.0.s8 %v809
      %v811 = vlaneseq
      %v812 = vshrl.u32 %v811, 7
      %v813 = vsub.s32 %v810, %v812
      %v814 = vrot.slane %v800, %v813
      %v815 = vcombine.high %v792, 0.0
      %v816 = vcombine.high %v799, 0.0
      %v817 = vcombine.high %v807, 0.0
      %v818 = vcombine.high %v814, 0.0
      %v819 = vcombine.high %v214, 0.0
      %v821 = vunpack.c.l.s4 1983009808
      %v822 = vunpack.c.0.s8 %v821
      %v823 = vlaneseq
      %v824 = vshrl.u32 %v823, 7
      %v825 = vsub.s32 %v822, %v824
      %v826 = vrot.slane %v214, %v825
      %v828 = vunpack.c.l.s4 1983009808
      %v829 = vunpack.c.0.s8 %v828
      %v830 = vlaneseq
      %v831 = vshrl.u32 %v830, 7
      %v832 = vsub.s32 %v829, %v831
      %v833 = vrot.slane %v819, %v832
      %v834 = vcombine.high %v826, 0.0
      %v836 = vunpack.c.l.s4 1934713408
      %v837 = vunpack.c.0.s8 %v836
      %v838 = vlaneseq
      %v839 = vshrl.u32 %v838, 7
      %v840 = vsub.s32 %v837, %v839
      %v841 = vrot.slane %v826, %v840
      %v843 = vunpack.c.l.s4 1934713408
      %v844 = vunpack.c.0.s8 %v843
      %v845 = vlaneseq
      %v846 = vshrl.u32 %v845, 7
      %v847 = vsub.s32 %v844, %v846
      %v848 = vrot.slane %v834, %v847
      %v849 = vcombine.high %v833, 0.0
      %v851 = vunpack.c.l.s4 1934713408
      %v852 = vunpack.c.0.s8 %v851
      %v853 = vlaneseq
      %v854 = vshrl.u32 %v853, 7
      %v855 = vsub.s32 %v852, %v854
      %v856 = vrot.slane %v833, %v855
      %v858 = vunpack.c.l.s4 1934713408
      %v859 = vunpack.c.0.s8 %v858
      %v860 = vlaneseq
      %v861 = vshrl.u32 %v860, 7
      %v862 = vsub.s32 %v859, %v861
      %v863 = vrot.slane %v849, %v862
      %v864 = vcombine.high %v841, 0.0
      %v865 = vcombine.high %v848, 0.0
      %v866 = vcombine.high %v856, 0.0
      %v867 = vcombine.high %v863, 0.0
      %v868 = vcombine.high %v218, 0.0
      %v870 = vunpack.c.l.s4 1983009808
      %v871 = vunpack.c.0.s8 %v870
      %v872 = vlaneseq
      %v873 = vshrl.u32 %v872, 7
      %v874 = vsub.s32 %v871, %v873
      %v875 = vrot.slane %v218, %v874
      %v877 = vunpack.c.l.s4 1983009808
      %v878 = vunpack.c.0.s8 %v877
      %v879 = vlaneseq
      %v880 = vshrl.u32 %v879, 7
      %v881 = vsub.s32 %v878, %v880
      %v882 = vrot.slane %v868, %v881
      %v883 = vcombine.high %v875, 0.0
      %v885 = vunpack.c.l.s4 1934713408
      %v886 = vunpack.c.0.s8 %v885
      %v887 = vlaneseq
      %v888 = vshrl.u32 %v887, 7
      %v889 = vsub.s32 %v886, %v888
      %v890 = vrot.slane %v875, %v889
      %v892 = vunpack.c.l.s4 1934713408
      %v893 = vunpack.c.0.s8 %v892
      %v894 = vlaneseq
      %v895 = vshrl.u32 %v894, 7
      %v896 = vsub.s32 %v893, %v895
      %v897 = vrot.slane %v883, %v896
      %v898 = vcombine.high %v882, 0.0
      %v900 = vunpack.c.l.s4 1934713408
      %v901 = vunpack.c.0.s8 %v900
      %v902 = vlaneseq
      %v903 = vshrl.u32 %v902, 7
      %v904 = vsub.s32 %v901, %v903
      %v905 = vrot.slane %v882, %v904
      %v907 = vunpack.c.l.s4 1934713408
      %v908 = vunpack.c.0.s8 %v907
      %v909 = vlaneseq
      %v910 = vshrl.u32 %v909, 7
      %v911 = vsub.s32 %v908, %v910
      %v912 = vrot.slane %v898, %v911
      %v913 = vcombine.high %v890, 0.0
      %v914 = vcombine.high %v897, 0.0
      %v915 = vcombine.high %v905, 0.0
      %v916 = vcombine.high %v912, 0.0
      %v917 = vcombine.high %v225, 0.0
      %v919 = vunpack.c.l.s4 1983009808
      %v920 = vunpack.c.0.s8 %v919
      %v921 = vlaneseq
      %v922 = vshrl.u32 %v921, 7
      %v923 = vsub.s32 %v920, %v922
      %v924 = vrot.slane %v225, %v923
      %v926 = vunpack.c.l.s4 1983009808
      %v927 = vunpack.c.0.s8 %v926
      %v928 = vlaneseq
      %v929 = vshrl.u32 %v928, 7
      %v930 = vsub.s32 %v927, %v929
      %v931 = vrot.slane %v917, %v930
      %v932 = vcombine.high %v924, 0.0
      %v934 = vunpack.c.l.s4 1934713408
      %v935 = vunpack.c.0.s8 %v934
      %v936 = vlaneseq
      %v937 = vshrl.u32 %v936, 7
      %v938 = vsub.s32 %v935, %v937
      %v939 = vrot.slane %v924, %v938
      %v941 = vunpack.c.l.s4 1934713408
      %v942 = vunpack.c.0.s8 %v941
      %v943 = vlaneseq
      %v944 = vshrl.u32 %v943, 7
      %v945 = vsub.s32 %v942, %v944
      %v946 = vrot.slane %v932, %v945
      %v947 = vcombine.high %v931, 0.0
      %v949 = vunpack.c.l.s4 1934713408
      %v950 = vunpack.c.0.s8 %v949
      %v951 = vlaneseq
      %v952 = vshrl.u32 %v951, 7
      %v953 = vsub.s32 %v950, %v952
      %v954 = vrot.slane %v931, %v953
      %v956 = vunpack.c.l.s4 1934713408
      %v957 = vunpack.c.0.s8 %v956
      %v958 = vlaneseq
      %v959 = vshrl.u32 %v958, 7
      %v960 = vsub.s32 %v957, %v959
      %v961 = vrot.slane %v947, %v960
      %v962 = vcombine.high %v939, 0.0
      %v963 = vcombine.high %v946, 0.0
      %v964 = vcombine.high %v954, 0.0
      %v965 = vcombine.high %v961, 0.0
      %v966 = vcombine.high %v229, 0.0
      %v968 = vunpack.c.l.s4 1983009808
      %v969 = vunpack.c.0.s8 %v968
      %v970 = vlaneseq
      %v971 = vshrl.u32 %v970, 7
      %v972 = vsub.s32 %v969, %v971
      %v973 = vrot.slane %v229, %v972
      %v975 = vunpack.c.l.s4 1983009808
      %v976 = vunpack.c.0.s8 %v975
      %v977 = vlaneseq
      %v978 = vshrl.u32 %v977, 7
      %v979 = vsub.s32 %v976, %v978
      %v980 = vrot.slane %v966, %v979
      %v981 = vcombine.high %v973, 0.0
      %v983 = vunpack.c.l.s4 1934713408
      %v984 = vunpack.c.0.s8 %v983
      %v985 = vlaneseq
      %v986 = vshrl.u32 %v985, 7
      %v987 = vsub.s32 %v984, %v986
      %v988 = vrot.slane %v973, %v987
      %v990 = vunpack.c.l.s4 1934713408
      %v991 = vunpack.c.0.s8 %v990
      %v992 = vlaneseq
      %v993 = vshrl.u32 %v992, 7
      %v994 = vsub.s32 %v991, %v993
      %v995 = vrot.slane %v981, %v994
      %v996 = vcombine.high %v980, 0.0
      %v998 = vunpack.c.l.s4 1934713408
      %v999 = vunpack.c.0.s8 %v998
      %v1000 = vlaneseq
      %v1001 = vshrl.u32 %v1000, 7
      %v1002 = vsub.s32 %v999, %v1001
      %v1003 = vrot.slane %v980, %v1002
      %v1005 = vunpack.c.l.s4 1934713408
      %v1006 = vunpack.c.0.s8 %v1005
      %v1007 = vlaneseq
      %v1008 = vshrl.u32 %v1007, 7
      %v1009 = vsub.s32 %v1006, %v1008
      %v1010 = vrot.slane %v996, %v1009
      %v1011 = vcombine.high %v988, 0.0
      %v1012 = vcombine.high %v995, 0.0
      %v1013 = vcombine.high %v1003, 0.0
      %v1014 = vcombine.high %v1010, 0.0
      %v1015 = vcombine.high %v236, 0.0
      %v1017 = vunpack.c.l.s4 1983009808
      %v1018 = vunpack.c.0.s8 %v1017
      %v1019 = vlaneseq
      %v1020 = vshrl.u32 %v1019, 7
      %v1021 = vsub.s32 %v1018, %v1020
      %v1022 = vrot.slane %v236, %v1021
      %v1024 = vunpack.c.l.s4 1983009808
      %v1025 = vunpack.c.0.s8 %v1024
      %v1026 = vlaneseq
      %v1027 = vshrl.u32 %v1026, 7
      %v1028 = vsub.s32 %v1025, %v1027
      %v1029 = vrot.slane %v1015, %v1028
      %v1030 = vcombine.high %v1022, 0.0
      %v1032 = vunpack.c.l.s4 1934713408
      %v1033 = vunpack.c.0.s8 %v1032
      %v1034 = vlaneseq
      %v1035 = vshrl.u32 %v1034, 7
      %v1036 = vsub.s32 %v1033, %v1035
      %v1037 = vrot.slane %v1022, %v1036
      %v1039 = vunpack.c.l.s4 1934713408
      %v1040 = vunpack.c.0.s8 %v1039
      %v1041 = vlaneseq
      %v1042 = vshrl.u32 %v1041, 7
      %v1043 = vsub.s32 %v1040, %v1042
      %v1044 = vrot.slane %v1030, %v1043
      %v1045 = vcombine.high %v1029, 0.0
      %v1047 = vunpack.c.l.s4 1934713408
      %v1048 = vunpack.c.0.s8 %v1047
      %v1049 = vlaneseq
      %v1050 = vshrl.u32 %v1049, 7
      %v1051 = vsub.s32 %v1048, %v1050
      %v1052 = vrot.slane %v1029, %v1051
      %v1054 = vunpack.c.l.s4 1934713408
      %v1055 = vunpack.c.0.s8 %v1054
      %v1056 = vlaneseq
      %v1057 = vshrl.u32 %v1056, 7
      %v1058 = vsub.s32 %v1055, %v1057
      %v1059 = vrot.slane %v1045, %v1058
      %v1060 = vcombine.high %v1037, 0.0
      %v1061 = vcombine.high %v1044, 0.0
      %v1062 = vcombine.high %v1052, 0.0
      %v1063 = vcombine.high %v1059, 0.0
      %v1064 = vcombine.high %v240, 0.0
      %v1066 = vunpack.c.l.s4 1983009808
      %v1067 = vunpack.c.0.s8 %v1066
      %v1068 = vlaneseq
      %v1069 = vshrl.u32 %v1068, 7
      %v1070 = vsub.s32 %v1067, %v1069
      %v1071 = vrot.slane %v240, %v1070
      %v1073 = vunpack.c.l.s4 1983009808
      %v1074 = vunpack.c.0.s8 %v1073
      %v1075 = vlaneseq
      %v1076 = vshrl.u32 %v1075, 7
      %v1077 = vsub.s32 %v1074, %v1076
      %v1078 = vrot.slane %v1064, %v1077
      %v1079 = vcombine.high %v1071, 0.0
      %v1081 = vunpack.c.l.s4 1934713408
      %v1082 = vunpack.c.0.s8 %v1081
      %v1083 = vlaneseq
      %v1084 = vshrl.u32 %v1083, 7
      %v1085 = vsub.s32 %v1082, %v1084
      %v1086 = vrot.slane %v1071, %v1085
      %v1088 = vunpack.c.l.s4 1934713408
      %v1089 = vunpack.c.0.s8 %v1088
      %v1090 = vlaneseq
      %v1091 = vshrl.u32 %v1090, 7
      %v1092 = vsub.s32 %v1089, %v1091
      %v1093 = vrot.slane %v1079, %v1092
      %v1094 = vcombine.high %v1078, 0.0
      %v1096 = vunpack.c.l.s4 1934713408
      %v1097 = vunpack.c.0.s8 %v1096
      %v1098 = vlaneseq
      %v1099 = vshrl.u32 %v1098, 7
      %v1100 = vsub.s32 %v1097, %v1099
      %v1101 = vrot.slane %v1078, %v1100
      %v1103 = vunpack.c.l.s4 1934713408
      %v1104 = vunpack.c.0.s8 %v1103
      %v1105 = vlaneseq
      %v1106 = vshrl.u32 %v1105, 7
      %v1107 = vsub.s32 %v1104, %v1106
      %v1108 = vrot.slane %v1094, %v1107
      %v1109 = vcombine.high %v1086, 0.0
      %v1110 = vcombine.high %v1093, 0.0
      %v1111 = vcombine.high %v1101, 0.0
      %v1112 = vcombine.high %v1108, 0.0
      %v1113 = vcombine.high %v247, 0.0
      %v1115 = vunpack.c.l.s4 1983009808
      %v1116 = vunpack.c.0.s8 %v1115
      %v1117 = vlaneseq
      %v1118 = vshrl.u32 %v1117, 7
      %v1119 = vsub.s32 %v1116, %v1118
      %v1120 = vrot.slane %v247, %v1119
      %v1122 = vunpack.c.l.s4 1983009808
      %v1123 = vunpack.c.0.s8 %v1122
      %v1124 = vlaneseq
      %v1125 = vshrl.u32 %v1124, 7
      %v1126 = vsub.s32 %v1123, %v1125
      %v1127 = vrot.slane %v1113, %v1126
      %v1128 = vcombine.high %v1120, 0.0
      %v1130 = vunpack.c.l.s4 1934713408
      %v1131 = vunpack.c.0.s8 %v1130
      %v1132 = vlaneseq
      %v1133 = vshrl.u32 %v1132, 7
      %v1134 = vsub.s32 %v1131, %v1133
      %v1135 = vrot.slane %v1120, %v1134
      %v1137 = vunpack.c.l.s4 1934713408
      %v1138 = vunpack.c.0.s8 %v1137
      %v1139 = vlaneseq
      %v1140 = vshrl.u32 %v1139, 7
      %v1141 = vsub.s32 %v1138, %v1140
      %v1142 = vrot.slane %v1128, %v1141
      %v1143 = vcombine.high %v1127, 0.0
      %v1145 = vunpack.c.l.s4 1934713408
      %v1146 = vunpack.c.0.s8 %v1145
      %v1147 = vlaneseq
      %v1148 = vshrl.u32 %v1147, 7
      %v1149 = vsub.s32 %v1146, %v1148
      %v1150 = vrot.slane %v1127, %v1149
      %v1152 = vunpack.c.l.s4 1934713408
      %v1153 = vunpack.c.0.s8 %v1152
      %v1154 = vlaneseq
      %v1155 = vshrl.u32 %v1154, 7
      %v1156 = vsub.s32 %v1153, %v1155
      %v1157 = vrot.slane %v1143, %v1156
      %v1158 = vcombine.high %v1135, 0.0
      %v1159 = vcombine.high %v1142, 0.0
      %v1160 = vcombine.high %v1150, 0.0
      %v1161 = vcombine.high %v1157, 0.0
      %v1162 = vcombine.high %v251, 0.0
      %v1164 = vunpack.c.l.s4 1983009808
      %v1165 = vunpack.c.0.s8 %v1164
      %v1166 = vlaneseq
      %v1167 = vshrl.u32 %v1166, 7
      %v1168 = vsub.s32 %v1165, %v1167
      %v1169 = vrot.slane %v251, %v1168
      %v1171 = vunpack.c.l.s4 1983009808
      %v1172 = vunpack.c.0.s8 %v1171
      %v1173 = vlaneseq
      %v1174 = vshrl.u32 %v1173, 7
      %v1175 = vsub.s32 %v1172, %v1174
      %v1176 = vrot.slane %v1162, %v1175
      %v1177 = vcombine.high %v1169, 0.0
      %v1179 = vunpack.c.l.s4 1934713408
      %v1180 = vunpack.c.0.s8 %v1179
      %v1181 = vlaneseq
      %v1182 = vshrl.u32 %v1181, 7
      %v1183 = vsub.s32 %v1180, %v1182
      %v1184 = vrot.slane %v1169, %v1183
      %v1186 = vunpack.c.l.s4 1934713408
      %v1187 = vunpack.c.0.s8 %v1186
      %v1188 = vlaneseq
      %v1189 = vshrl.u32 %v1188, 7
      %v1190 = vsub.s32 %v1187, %v1189
      %v1191 = vrot.slane %v1177, %v1190
      %v1192 = vcombine.high %v1176, 0.0
      %v1194 = vunpack.c.l.s4 1934713408
      %v1195 = vunpack.c.0.s8 %v1194
      %v1196 = vlaneseq
      %v1197 = vshrl.u32 %v1196, 7
      %v1198 = vsub.s32 %v1195, %v1197
      %v1199 = vrot.slane %v1176, %v1198
      %v1201 = vunpack.c.l.s4 1934713408
      %v1202 = vunpack.c.0.s8 %v1201
      %v1203 = vlaneseq
      %v1204 = vshrl.u32 %v1203, 7
      %v1205 = vsub.s32 %v1202, %v1204
      %v1206 = vrot.slane %v1192, %v1205
      %v1207 = vcombine.high %v1184, 0.0
      %v1208 = vcombine.high %v1191, 0.0
      %v1209 = vcombine.high %v1199, 0.0
      %v1210 = vcombine.high %v1206, 0.0
      %v1211 = vcombine.high %v258, 0.0
      %v1213 = vunpack.c.l.s4 1983009808
      %v1214 = vunpack.c.0.s8 %v1213
      %v1215 = vlaneseq
      %v1216 = vshrl.u32 %v1215, 7
      %v1217 = vsub.s32 %v1214, %v1216
      %v1218 = vrot.slane %v258, %v1217
      %v1220 = vunpack.c.l.s4 1983009808
      %v1221 = vunpack.c.0.s8 %v1220
      %v1222 = vlaneseq
      %v1223 = vshrl.u32 %v1222, 7
      %v1224 = vsub.s32 %v1221, %v1223
      %v1225 = vrot.slane %v1211, %v1224
      %v1226 = vcombine.high %v1218, 0.0
      %v1228 = vunpack.c.l.s4 1934713408
      %v1229 = vunpack.c.0.s8 %v1228
      %v1230 = vlaneseq
      %v1231 = vshrl.u32 %v1230, 7
      %v1232 = vsub.s32 %v1229, %v1231
      %v1233 = vrot.slane %v1218, %v1232
      %v1235 = vunpack.c.l.s4 1934713408
      %v1236 = vunpack.c.0.s8 %v1235
      %v1237 = vlaneseq
      %v1238 = vshrl.u32 %v1237, 7
      %v1239 = vsub.s32 %v1236, %v1238
      %v1240 = vrot.slane %v1226, %v1239
      %v1241 = vcombine.high %v1225, 0.0
      %v1243 = vunpack.c.l.s4 1934713408
      %v1244 = vunpack.c.0.s8 %v1243
      %v1245 = vlaneseq
      %v1246 = vshrl.u32 %v1245, 7
      %v1247 = vsub.s32 %v1244, %v1246
      %v1248 = vrot.slane %v1225, %v1247
      %v1250 = vunpack.c.l.s4 1934713408
      %v1251 = vunpack.c.0.s8 %v1250
      %v1252 = vlaneseq
      %v1253 = vshrl.u32 %v1252, 7
      %v1254 = vsub.s32 %v1251, %v1253
      %v1255 = vrot.slane %v1241, %v1254
      %v1256 = vcombine.high %v1233, 0.0
      %v1257 = vcombine.high %v1240, 0.0
      %v1258 = vcombine.high %v1248, 0.0
      %v1259 = vcombine.high %v1255, 0.0
      %v1260 = vcombine.high %v262, 0.0
      %v1262 = vunpack.c.l.s4 1983009808
      %v1263 = vunpack.c.0.s8 %v1262
      %v1264 = vlaneseq
      %v1265 = vshrl.u32 %v1264, 7
      %v1266 = vsub.s32 %v1263, %v1265
      %v1267 = vrot.slane %v262, %v1266
      %v1269 = vunpack.c.l.s4 1983009808
      %v1270 = vunpack.c.0.s8 %v1269
      %v1271 = vlaneseq
      %v1272 = vshrl.u32 %v1271, 7
      %v1273 = vsub.s32 %v1270, %v1272
      %v1274 = vrot.slane %v1260, %v1273
      %v1275 = vcombine.high %v1267, 0.0
      %v1277 = vunpack.c.l.s4 1934713408
      %v1278 = vunpack.c.0.s8 %v1277
      %v1279 = vlaneseq
      %v1280 = vshrl.u32 %v1279, 7
      %v1281 = vsub.s32 %v1278, %v1280
      %v1282 = vrot.slane %v1267, %v1281
      %v1284 = vunpack.c.l.s4 1934713408
      %v1285 = vunpack.c.0.s8 %v1284
      %v1286 = vlaneseq
      %v1287 = vshrl.u32 %v1286, 7
      %v1288 = vsub.s32 %v1285, %v1287
      %v1289 = vrot.slane %v1275, %v1288
      %v1290 = vcombine.high %v1274, 0.0
      %v1292 = vunpack.c.l.s4 1934713408
      %v1293 = vunpack.c.0.s8 %v1292
      %v1294 = vlaneseq
      %v1295 = vshrl.u32 %v1294, 7
      %v1296 = vsub.s32 %v1293, %v1295
      %v1297 = vrot.slane %v1274, %v1296
      %v1299 = vunpack.c.l.s4 1934713408
      %v1300 = vunpack.c.0.s8 %v1299
      %v1301 = vlaneseq
      %v1302 = vshrl.u32 %v1301, 7
      %v1303 = vsub.s32 %v1300, %v1302
      %v1304 = vrot.slane %v1290, %v1303
      %v1305 = vcombine.high %v1282, 0.0
      %v1306 = vcombine.high %v1289, 0.0
      %v1307 = vcombine.high %v1297, 0.0
      %v1308 = vcombine.high %v1304, 0.0
      %v1309 = vcombine.high %v269, 0.0
      %v1311 = vunpack.c.l.s4 1983009808
      %v1312 = vunpack.c.0.s8 %v1311
      %v1313 = vlaneseq
      %v1314 = vshrl.u32 %v1313, 7
      %v1315 = vsub.s32 %v1312, %v1314
      %v1316 = vrot.slane %v269, %v1315
      %v1318 = vunpack.c.l.s4 1983009808
      %v1319 = vunpack.c.0.s8 %v1318
      %v1320 = vlaneseq
      %v1321 = vshrl.u32 %v1320, 7
      %v1322 = vsub.s32 %v1319, %v1321
      %v1323 = vrot.slane %v1309, %v1322
      %v1324 = vcombine.high %v1316, 0.0
      %v1326 = vunpack.c.l.s4 1934713408
      %v1327 = vunpack.c.0.s8 %v1326
      %v1328 = vlaneseq
      %v1329 = vshrl.u32 %v1328, 7
      %v1330 = vsub.s32 %v1327, %v1329
      %v1331 = vrot.slane %v1316, %v1330
      %v1333 = vunpack.c.l.s4 1934713408
      %v1334 = vunpack.c.0.s8 %v1333
      %v1335 = vlaneseq
      %v1336 = vshrl.u32 %v1335, 7
      %v1337 = vsub.s32 %v1334, %v1336
      %v1338 = vrot.slane %v1324, %v1337
      %v1339 = vcombine.high %v1323, 0.0
      %v1341 = vunpack.c.l.s4 1934713408
      %v1342 = vunpack.c.0.s8 %v1341
      %v1343 = vlaneseq
      %v1344 = vshrl.u32 %v1343, 7
      %v1345 = vsub.s32 %v1342, %v1344
      %v1346 = vrot.slane %v1323, %v1345
      %v1348 = vunpack.c.l.s4 1934713408
      %v1349 = vunpack.c.0.s8 %v1348
      %v1350 = vlaneseq
      %v1351 = vshrl.u32 %v1350, 7
      %v1352 = vsub.s32 %v1349, %v1351
      %v1353 = vrot.slane %v1339, %v1352
      %v1354 = vcombine.high %v1331, 0.0
      %v1355 = vcombine.high %v1338, 0.0
      %v1356 = vcombine.high %v1346, 0.0
      %v1357 = vcombine.high %v1353, 0.0
      %v1358 = vcombine.high %v273, 0.0
      %v1360 = vunpack.c.l.s4 1983009808
      %v1361 = vunpack.c.0.s8 %v1360
      %v1362 = vlaneseq
      %v1363 = vshrl.u32 %v1362, 7
      %v1364 = vsub.s32 %v1361, %v1363
      %v1365 = vrot.slane %v273, %v1364
      %v1367 = vunpack.c.l.s4 1983009808
      %v1368 = vunpack.c.0.s8 %v1367
      %v1369 = vlaneseq
      %v1370 = vshrl.u32 %v1369, 7
      %v1371 = vsub.s32 %v1368, %v1370
      %v1372 = vrot.slane %v1358, %v1371
      %v1373 = vcombine.high %v1365, 0.0
      %v1375 = vunpack.c.l.s4 1934713408
      %v1376 = vunpack.c.0.s8 %v1375
      %v1377 = vlaneseq
      %v1378 = vshrl.u32 %v1377, 7
      %v1379 = vsub.s32 %v1376, %v1378
      %v1380 = vrot.slane %v1365, %v1379
      %v1382 = vunpack.c.l.s4 1934713408
      %v1383 = vunpack.c.0.s8 %v1382
      %v1384 = vlaneseq
      %v1385 = vshrl.u32 %v1384, 7
      %v1386 = vsub.s32 %v1383, %v1385
      %v1387 = vrot.slane %v1373, %v1386
      %v1388 = vcombine.high %v1372, 0.0
      %v1390 = vunpack.c.l.s4 1934713408
      %v1391 = vunpack.c.0.s8 %v1390
      %v1392 = vlaneseq
      %v1393 = vshrl.u32 %v1392, 7
      %v1394 = vsub.s32 %v1391, %v1393
      %v1395 = vrot.slane %v1372, %v1394
      %v1397 = vunpack.c.l.s4 1934713408
      %v1398 = vunpack.c.0.s8 %v1397
      %v1399 = vlaneseq
      %v1400 = vshrl.u32 %v1399, 7
      %v1401 = vsub.s32 %v1398, %v1400
      %v1402 = vrot.slane %v1388, %v1401
      %v1403 = vcombine.high %v1380, 0.0
      %v1404 = vcombine.high %v1387, 0.0
      %v1405 = vcombine.high %v1395, 0.0
      %v1406 = vcombine.high %v1402, 0.0
      %v1407 = vcombine.high %v280, 0.0
      %v1409 = vunpack.c.l.s4 1983009808
      %v1410 = vunpack.c.0.s8 %v1409
      %v1411 = vlaneseq
      %v1412 = vshrl.u32 %v1411, 7
      %v1413 = vsub.s32 %v1410, %v1412
      %v1414 = vrot.slane %v280, %v1413
      %v1416 = vunpack.c.l.s4 1983009808
      %v1417 = vunpack.c.0.s8 %v1416
      %v1418 = vlaneseq
      %v1419 = vshrl.u32 %v1418, 7
      %v1420 = vsub.s32 %v1417, %v1419
      %v1421 = vrot.slane %v1407, %v1420
      %v1422 = vcombine.high %v1414, 0.0
      %v1424 = vunpack.c.l.s4 1934713408
      %v1425 = vunpack.c.0.s8 %v1424
      %v1426 = vlaneseq
      %v1427 = vshrl.u32 %v1426, 7
      %v1428 = vsub.s32 %v1425, %v1427
      %v1429 = vrot.slane %v1414, %v1428
      %v1431 = vunpack.c.l.s4 1934713408
      %v1432 = vunpack.c.0.s8 %v1431
      %v1433 = vlaneseq
      %v1434 = vshrl.u32 %v1433, 7
      %v1435 = vsub.s32 %v1432, %v1434
      %v1436 = vrot.slane %v1422, %v1435
      %v1437 = vcombine.high %v1421, 0.0
      %v1439 = vunpack.c.l.s4 1934713408
      %v1440 = vunpack.c.0.s8 %v1439
      %v1441 = vlaneseq
      %v1442 = vshrl.u32 %v1441, 7
      %v1443 = vsub.s32 %v1440, %v1442
      %v1444 = vrot.slane %v1421, %v1443
      %v1446 = vunpack.c.l.s4 1934713408
      %v1447 = vunpack.c.0.s8 %v1446
      %v1448 = vlaneseq
      %v1449 = vshrl.u32 %v1448, 7
      %v1450 = vsub.s32 %v1447, %v1449
      %v1451 = vrot.slane %v1437, %v1450
      %v1452 = vcombine.high %v1429, 0.0
      %v1453 = vcombine.high %v1436, 0.0
      %v1454 = vcombine.high %v1444, 0.0
      %v1455 = vcombine.high %v1451, 0.0
      %v1456 = vcombine.high %v284, 0.0
      %v1458 = vunpack.c.l.s4 1983009808
      %v1459 = vunpack.c.0.s8 %v1458
      %v1460 = vlaneseq
      %v1461 = vshrl.u32 %v1460, 7
      %v1462 = vsub.s32 %v1459, %v1461
      %v1463 = vrot.slane %v284, %v1462
      %v1465 = vunpack.c.l.s4 1983009808
      %v1466 = vunpack.c.0.s8 %v1465
      %v1467 = vlaneseq
      %v1468 = vshrl.u32 %v1467, 7
      %v1469 = vsub.s32 %v1466, %v1468
      %v1470 = vrot.slane %v1456, %v1469
      %v1471 = vcombine.high %v1463, 0.0
      %v1473 = vunpack.c.l.s4 1934713408
      %v1474 = vunpack.c.0.s8 %v1473
      %v1475 = vlaneseq
      %v1476 = vshrl.u32 %v1475, 7
      %v1477 = vsub.s32 %v1474, %v1476
      %v1478 = vrot.slane %v1463, %v1477
      %v1480 = vunpack.c.l.s4 1934713408
      %v1481 = vunpack.c.0.s8 %v1480
      %v1482 = vlaneseq
      %v1483 = vshrl.u32 %v1482, 7
      %v1484 = vsub.s32 %v1481, %v1483
      %v1485 = vrot.slane %v1471, %v1484
      %v1486 = vcombine.high %v1470, 0.0
      %v1488 = vunpack.c.l.s4 1934713408
      %v1489 = vunpack.c.0.s8 %v1488
      %v1490 = vlaneseq
      %v1491 = vshrl.u32 %v1490, 7
      %v1492 = vsub.s32 %v1489, %v1491
      %v1493 = vrot.slane %v1470, %v1492
      %v1495 = vunpack.c.l.s4 1934713408
      %v1496 = vunpack.c.0.s8 %v1495
      %v1497 = vlaneseq
      %v1498 = vshrl.u32 %v1497, 7
      %v1499 = vsub.s32 %v1496, %v1498
      %v1500 = vrot.slane %v1486, %v1499
      %v1501 = vcombine.high %v1478, 0.0
      %v1502 = vcombine.high %v1485, 0.0
      %v1503 = vcombine.high %v1493, 0.0
      %v1504 = vcombine.high %v1500, 0.0
      %v1505 = vcombine.high %v291, 0.0
      %v1507 = vunpack.c.l.s4 1983009808
      %v1508 = vunpack.c.0.s8 %v1507
      %v1509 = vlaneseq
      %v1510 = vshrl.u32 %v1509, 7
      %v1511 = vsub.s32 %v1508, %v1510
      %v1512 = vrot.slane %v291, %v1511
      %v1514 = vunpack.c.l.s4 1983009808
      %v1515 = vunpack.c.0.s8 %v1514
      %v1516 = vlaneseq
      %v1517 = vshrl.u32 %v1516, 7
      %v1518 = vsub.s32 %v1515, %v1517
      %v1519 = vrot.slane %v1505, %v1518
      %v1520 = vcombine.high %v1512, 0.0
      %v1522 = vunpack.c.l.s4 1934713408
      %v1523 = vunpack.c.0.s8 %v1522
      %v1524 = vlaneseq
      %v1525 = vshrl.u32 %v1524, 7
      %v1526 = vsub.s32 %v1523, %v1525
      %v1527 = vrot.slane %v1512, %v1526
      %v1529 = vunpack.c.l.s4 1934713408
      %v1530 = vunpack.c.0.s8 %v1529
      %v1531 = vlaneseq
      %v1532 = vshrl.u32 %v1531, 7
      %v1533 = vsub.s32 %v1530, %v1532
      %v1534 = vrot.slane %v1520, %v1533
      %v1535 = vcombine.high %v1519, 0.0
      %v1537 = vunpack.c.l.s4 1934713408
      %v1538 = vunpack.c.0.s8 %v1537
      %v1539 = vlaneseq
      %v1540 = vshrl.u32 %v1539, 7
      %v1541 = vsub.s32 %v1538, %v1540
      %v1542 = vrot.slane %v1519, %v1541
      %v1544 = vunpack.c.l.s4 1934713408
      %v1545 = vunpack.c.0.s8 %v1544
      %v1546 = vlaneseq
      %v1547 = vshrl.u32 %v1546, 7
      %v1548 = vsub.s32 %v1545, %v1547
      %v1549 = vrot.slane %v1535, %v1548
      %v1550 = vcombine.high %v1527, 0.0
      %v1551 = vcombine.high %v1534, 0.0
      %v1552 = vcombine.high %v1542, 0.0
      %v1553 = vcombine.high %v1549, 0.0
      %v1554 = vcombine.high %v295, 0.0
      %v1556 = vunpack.c.l.s4 1983009808
      %v1557 = vunpack.c.0.s8 %v1556
      %v1558 = vlaneseq
      %v1559 = vshrl.u32 %v1558, 7
      %v1560 = vsub.s32 %v1557, %v1559
      %v1561 = vrot.slane %v295, %v1560
      %v1563 = vunpack.c.l.s4 1983009808
      %v1564 = vunpack.c.0.s8 %v1563
      %v1565 = vlaneseq
      %v1566 = vshrl.u32 %v1565, 7
      %v1567 = vsub.s32 %v1564, %v1566
      %v1568 = vrot.slane %v1554, %v1567
      %v1569 = vcombine.high %v1561, 0.0
      %v1571 = vunpack.c.l.s4 1934713408
      %v1572 = vunpack.c.0.s8 %v1571
      %v1573 = vlaneseq
      %v1574 = vshrl.u32 %v1573, 7
      %v1575 = vsub.s32 %v1572, %v1574
      %v1576 = vrot.slane %v1561, %v1575
      %v1578 = vunpack.c.l.s4 1934713408
      %v1579 = vunpack.c.0.s8 %v1578
      %v1580 = vlaneseq
      %v1581 = vshrl.u32 %v1580, 7
      %v1582 = vsub.s32 %v1579, %v1581
      %v1583 = vrot.slane %v1569, %v1582
      %v1584 = vcombine.high %v1568, 0.0
      %v1586 = vunpack.c.l.s4 1934713408
      %v1587 = vunpack.c.0.s8 %v1586
      %v1588 = vlaneseq
      %v1589 = vshrl.u32 %v1588, 7
      %v1590 = vsub.s32 %v1587, %v1589
      %v1591 = vrot.slane %v1568, %v1590
      %v1593 = vunpack.c.l.s4 1934713408
      %v1594 = vunpack.c.0.s8 %v1593
      %v1595 = vlaneseq
      %v1596 = vshrl.u32 %v1595, 7
      %v1597 = vsub.s32 %v1594, %v1596
      %v1598 = vrot.slane %v1584, %v1597
      %v1599 = vcombine.high %v1576, 0.0
      %v1600 = vcombine.high %v1583, 0.0
      %v1601 = vcombine.high %v1591, 0.0
      %v1602 = vcombine.high %v1598, 0.0
      %v1603 = vcombine.high %v302, 0.0
      %v1605 = vunpack.c.l.s4 1983009808
      %v1606 = vunpack.c.0.s8 %v1605
      %v1607 = vlaneseq
      %v1608 = vshrl.u32 %v1607, 7
      %v1609 = vsub.s32 %v1606, %v1608
      %v1610 = vrot.slane %v302, %v1609
      %v1612 = vunpack.c.l.s4 1983009808
      %v1613 = vunpack.c.0.s8 %v1612
      %v1614 = vlaneseq
      %v1615 = vshrl.u32 %v1614, 7
      %v1616 = vsub.s32 %v1613, %v1615
      %v1617 = vrot.slane %v1603, %v1616
      %v1618 = vcombine.high %v1610, 0.0
      %v1620 = vunpack.c.l.s4 1934713408
      %v1621 = vunpack.c.0.s8 %v1620
      %v1622 = vlaneseq
      %v1623 = vshrl.u32 %v1622, 7
      %v1624 = vsub.s32 %v1621, %v1623
      %v1625 = vrot.slane %v1610, %v1624
      %v1627 = vunpack.c.l.s4 1934713408
      %v1628 = vunpack.c.0.s8 %v1627
      %v1629 = vlaneseq
      %v1630 = vshrl.u32 %v1629, 7
      %v1631 = vsub.s32 %v1628, %v1630
      %v1632 = vrot.slane %v1618, %v1631
      %v1633 = vcombine.high %v1617, 0.0
      %v1635 = vunpack.c.l.s4 1934713408
      %v1636 = vunpack.c.0.s8 %v1635
      %v1637 = vlaneseq
      %v1638 = vshrl.u32 %v1637, 7
      %v1639 = vsub.s32 %v1636, %v1638
      %v1640 = vrot.slane %v1617, %v1639
      %v1642 = vunpack.c.l.s4 1934713408
      %v1643 = vunpack.c.0.s8 %v1642
      %v1644 = vlaneseq
      %v1645 = vshrl.u32 %v1644, 7
      %v1646 = vsub.s32 %v1643, %v1645
      %v1647 = vrot.slane %v1633, %v1646
      %v1648 = vcombine.high %v1625, 0.0
      %v1649 = vcombine.high %v1632, 0.0
      %v1650 = vcombine.high %v1640, 0.0
      %v1651 = vcombine.high %v1647, 0.0
      %v1652 = vcombine.high %v306, 0.0
      %v1654 = vunpack.c.l.s4 1983009808
      %v1655 = vunpack.c.0.s8 %v1654
      %v1656 = vlaneseq
      %v1657 = vshrl.u32 %v1656, 7
      %v1658 = vsub.s32 %v1655, %v1657
      %v1659 = vrot.slane %v306, %v1658
      %v1661 = vunpack.c.l.s4 1983009808
      %v1662 = vunpack.c.0.s8 %v1661
      %v1663 = vlaneseq
      %v1664 = vshrl.u32 %v1663, 7
      %v1665 = vsub.s32 %v1662, %v1664
      %v1666 = vrot.slane %v1652, %v1665
      %v1667 = vcombine.high %v1659, 0.0
      %v1669 = vunpack.c.l.s4 1934713408
      %v1670 = vunpack.c.0.s8 %v1669
      %v1671 = vlaneseq
      %v1672 = vshrl.u32 %v1671, 7
      %v1673 = vsub.s32 %v1670, %v1672
      %v1674 = vrot.slane %v1659, %v1673
      %v1676 = vunpack.c.l.s4 1934713408
      %v1677 = vunpack.c.0.s8 %v1676
      %v1678 = vlaneseq
      %v1679 = vshrl.u32 %v1678, 7
      %v1680 = vsub.s32 %v1677, %v1679
      %v1681 = vrot.slane %v1667, %v1680
      %v1682 = vcombine.high %v1666, 0.0
      %v1684 = vunpack.c.l.s4 1934713408
      %v1685 = vunpack.c.0.s8 %v1684
      %v1686 = vlaneseq
      %v1687 = vshrl.u32 %v1686, 7
      %v1688 = vsub.s32 %v1685, %v1687
      %v1689 = vrot.slane %v1666, %v1688
      %v1691 = vunpack.c.l.s4 1934713408
      %v1692 = vunpack.c.0.s8 %v1691
      %v1693 = vlaneseq
      %v1694 = vshrl.u32 %v1693, 7
      %v1695 = vsub.s32 %v1692, %v1694
      %v1696 = vrot.slane %v1682, %v1695
      %v1697 = vcombine.high %v1674, 0.0
      %v1698 = vcombine.high %v1681, 0.0
      %v1699 = vcombine.high %v1689, 0.0
      %v1700 = vcombine.high %v1696, 0.0
      %v1701 = vcombine.high %v313, 0.0
      %v1703 = vunpack.c.l.s4 1983009808
      %v1704 = vunpack.c.0.s8 %v1703
      %v1705 = vlaneseq
      %v1706 = vshrl.u32 %v1705, 7
      %v1707 = vsub.s32 %v1704, %v1706
      %v1708 = vrot.slane %v313, %v1707
      %v1710 = vunpack.c.l.s4 1983009808
      %v1711 = vunpack.c.0.s8 %v1710
      %v1712 = vlaneseq
      %v1713 = vshrl.u32 %v1712, 7
      %v1714 = vsub.s32 %v1711, %v1713
      %v1715 = vrot.slane %v1701, %v1714
      %v1716 = vcombine.high %v1708, 0.0
      %v1718 = vunpack.c.l.s4 1934713408
      %v1719 = vunpack.c.0.s8 %v1718
      %v1720 = vlaneseq
      %v1721 = vshrl.u32 %v1720, 7
      %v1722 = vsub.s32 %v1719, %v1721
      %v1723 = vrot.slane %v1708, %v1722
      %v1725 = vunpack.c.l.s4 1934713408
      %v1726 = vunpack.c.0.s8 %v1725
      %v1727 = vlaneseq
      %v1728 = vshrl.u32 %v1727, 7
      %v1729 = vsub.s32 %v1726, %v1728
      %v1730 = vrot.slane %v1716, %v1729
      %v1731 = vcombine.high %v1715, 0.0
      %v1733 = vunpack.c.l.s4 1934713408
      %v1734 = vunpack.c.0.s8 %v1733
      %v1735 = vlaneseq
      %v1736 = vshrl.u32 %v1735, 7
      %v1737 = vsub.s32 %v1734, %v1736
      %v1738 = vrot.slane %v1715, %v1737
      %v1740 = vunpack.c.l.s4 1934713408
      %v1741 = vunpack.c.0.s8 %v1740
      %v1742 = vlaneseq
      %v1743 = vshrl.u32 %v1742, 7
      %v1744 = vsub.s32 %v1741, %v1743
      %v1745 = vrot.slane %v1731, %v1744
      %v1746 = vcombine.high %v1723, 0.0
      %v1747 = vcombine.high %v1730, 0.0
      %v1748 = vcombine.high %v1738, 0.0
      %v1749 = vcombine.high %v1745, 0.0
      %v1750 = vcombine.high %v317, 0.0
      %v1752 = vunpack.c.l.s4 1983009808
      %v1753 = vunpack.c.0.s8 %v1752
      %v1754 = vlaneseq
      %v1755 = vshrl.u32 %v1754, 7
      %v1756 = vsub.s32 %v1753, %v1755
      %v1757 = vrot.slane %v317, %v1756
      %v1759 = vunpack.c.l.s4 1983009808
      %v1760 = vunpack.c.0.s8 %v1759
      %v1761 = vlaneseq
      %v1762 = vshrl.u32 %v1761, 7
      %v1763 = vsub.s32 %v1760, %v1762
      %v1764 = vrot.slane %v1750, %v1763
      %v1765 = vcombine.high %v1757, 0.0
      %v1767 = vunpack.c.l.s4 1934713408
      %v1768 = vunpack.c.0.s8 %v1767
      %v1769 = vlaneseq
      %v1770 = vshrl.u32 %v1769, 7
      %v1771 = vsub.s32 %v1768, %v1770
      %v1772 = vrot.slane %v1757, %v1771
      %v1774 = vunpack.c.l.s4 1934713408
      %v1775 = vunpack.c.0.s8 %v1774
      %v1776 = vlaneseq
      %v1777 = vshrl.u32 %v1776, 7
      %v1778 = vsub.s32 %v1775, %v1777
      %v1779 = vrot.slane %v1765, %v1778
      %v1780 = vcombine.high %v1764, 0.0
      %v1782 = vunpack.c.l.s4 1934713408
      %v1783 = vunpack.c.0.s8 %v1782
      %v1784 = vlaneseq
      %v1785 = vshrl.u32 %v1784, 7
      %v1786 = vsub.s32 %v1783, %v1785
      %v1787 = vrot.slane %v1764, %v1786
      %v1789 = vunpack.c.l.s4 1934713408
      %v1790 = vunpack.c.0.s8 %v1789
      %v1791 = vlaneseq
      %v1792 = vshrl.u32 %v1791, 7
      %v1793 = vsub.s32 %v1790, %v1792
      %v1794 = vrot.slane %v1780, %v1793
      %v1795 = vcombine.high %v1772, 0.0
      %v1796 = vcombine.high %v1779, 0.0
      %v1797 = vcombine.high %v1787, 0.0
      %v1798 = vcombine.high %v1794, 0.0
      %v1799 = vcombine.high %v324, 0.0
      %v1801 = vunpack.c.l.s4 1983009808
      %v1802 = vunpack.c.0.s8 %v1801
      %v1803 = vlaneseq
      %v1804 = vshrl.u32 %v1803, 7
      %v1805 = vsub.s32 %v1802, %v1804
      %v1806 = vrot.slane %v324, %v1805
      %v1808 = vunpack.c.l.s4 1983009808
      %v1809 = vunpack.c.0.s8 %v1808
      %v1810 = vlaneseq
      %v1811 = vshrl.u32 %v1810, 7
      %v1812 = vsub.s32 %v1809, %v1811
      %v1813 = vrot.slane %v1799, %v1812
      %v1814 = vcombine.high %v1806, 0.0
      %v1816 = vunpack.c.l.s4 1934713408
      %v1817 = vunpack.c.0.s8 %v1816
      %v1818 = vlaneseq
      %v1819 = vshrl.u32 %v1818, 7
      %v1820 = vsub.s32 %v1817, %v1819
      %v1821 = vrot.slane %v1806, %v1820
      %v1823 = vunpack.c.l.s4 1934713408
      %v1824 = vunpack.c.0.s8 %v1823
      %v1825 = vlaneseq
      %v1826 = vshrl.u32 %v1825, 7
      %v1827 = vsub.s32 %v1824, %v1826
      %v1828 = vrot.slane %v1814, %v1827
      %v1829 = vcombine.high %v1813, 0.0
      %v1831 = vunpack.c.l.s4 1934713408
      %v1832 = vunpack.c.0.s8 %v1831
      %v1833 = vlaneseq
      %v1834 = vshrl.u32 %v1833, 7
      %v1835 = vsub.s32 %v1832, %v1834
      %v1836 = vrot.slane %v1813, %v1835
      %v1838 = vunpack.c.l.s4 1934713408
      %v1839 = vunpack.c.0.s8 %v1838
      %v1840 = vlaneseq
      %v1841 = vshrl.u32 %v1840, 7
      %v1842 = vsub.s32 %v1839, %v1841
      %v1843 = vrot.slane %v1829, %v1842
      %v1844 = vcombine.high %v1821, 0.0
      %v1845 = vcombine.high %v1828, 0.0
      %v1846 = vcombine.high %v1836, 0.0
      %v1847 = vcombine.high %v1843, 0.0
      %v1848 = vcombine.high %v328, 0.0
      %v1850 = vunpack.c.l.s4 1983009808
      %v1851 = vunpack.c.0.s8 %v1850
      %v1852 = vlaneseq
      %v1853 = vshrl.u32 %v1852, 7
      %v1854 = vsub.s32 %v1851, %v1853
      %v1855 = vrot.slane %v328, %v1854
      %v1857 = vunpack.c.l.s4 1983009808
      %v1858 = vunpack.c.0.s8 %v1857
      %v1859 = vlaneseq
      %v1860 = vshrl.u32 %v1859, 7
      %v1861 = vsub.s32 %v1858, %v1860
      %v1862 = vrot.slane %v1848, %v1861
      %v1863 = vcombine.high %v1855, 0.0
      %v1865 = vunpack.c.l.s4 1934713408
      %v1866 = vunpack.c.0.s8 %v1865
      %v1867 = vlaneseq
      %v1868 = vshrl.u32 %v1867, 7
      %v1869 = vsub.s32 %v1866, %v1868
      %v1870 = vrot.slane %v1855, %v1869
      %v1872 = vunpack.c.l.s4 1934713408
      %v1873 = vunpack.c.0.s8 %v1872
      %v1874 = vlaneseq
      %v1875 = vshrl.u32 %v1874, 7
      %v1876 = vsub.s32 %v1873, %v1875
      %v1877 = vrot.slane %v1863, %v1876
      %v1878 = vcombine.high %v1862, 0.0
      %v1880 = vunpack.c.l.s4 1934713408
      %v1881 = vunpack.c.0.s8 %v1880
      %v1882 = vlaneseq
      %v1883 = vshrl.u32 %v1882, 7
      %v1884 = vsub.s32 %v1881, %v1883
      %v1885 = vrot.slane %v1862, %v1884
      %v1887 = vunpack.c.l.s4 1934713408
      %v1888 = vunpack.c.0.s8 %v1887
      %v1889 = vlaneseq
      %v1890 = vshrl.u32 %v1889, 7
      %v1891 = vsub.s32 %v1888, %v1890
      %v1892 = vrot.slane %v1878, %v1891
      %v1893 = vcombine.high %v1870, 0.0
      %v1894 = vcombine.high %v1877, 0.0
      %v1895 = vcombine.high %v1885, 0.0
      %v1896 = vcombine.high %v1892, 0.0
      %1913 = vrot.lane.b32.xlu0 %v374, 2
      %v1914 = vpop.permute.xlu0 %1913
      %1915 = vrot.lane.b32.xlu0 %v472, 2
      %v1916 = vpop.permute.xlu0 %1915
      %1917 = vrot.lane.b32.xlu0 %v570, 2
      %v1918 = vpop.permute.xlu0 %1917
      %1919 = vrot.lane.b32.xlu0 %v668, 2
      %v1920 = vpop.permute.xlu0 %1919
      %1921 = vrot.lane.b32.xlu0 %v766, 2
      %v1922 = vpop.permute.xlu0 %1921
      %1923 = vrot.lane.b32.xlu0 %v864, 2
      %v1924 = vpop.permute.xlu0 %1923
      %1925 = vrot.lane.b32.xlu0 %v962, 2
      %v1926 = vpop.permute.xlu0 %1925
      %1927 = vrot.lane.b32.xlu0 %v1060, 2
      %v1928 = vpop.permute.xlu0 %1927
      %1929 = vrot.lane.b32.xlu0 %v1158, 2
      %v1930 = vpop.permute.xlu0 %1929
      %1931 = vrot.lane.b32.xlu0 %v1256, 2
      %v1932 = vpop.permute.xlu0 %1931
      %1933 = vrot.lane.b32.xlu0 %v1354, 2
      %v1934 = vpop.permute.xlu0 %1933
      %1935 = vrot.lane.b32.xlu0 %v1452, 2
      %v1936 = vpop.permute.xlu0 %1935
      %1937 = vrot.lane.b32.xlu0 %v1550, 2
      %v1938 = vpop.permute.xlu0 %1937
      %1939 = vrot.lane.b32.xlu0 %v1648, 2
      %v1940 = vpop.permute.xlu0 %1939
      %1941 = vrot.lane.b32.xlu0 %v1746, 2
      %v1942 = vpop.permute.xlu0 %1941
      %1943 = vrot.lane.b32.xlu0 %v1844, 2
      %v1944 = vpop.permute.xlu0 %1943
      %1977 = vrot.lane.b32.xlu0 %v358, 4
      %v1978 = vpop.permute.xlu0 %1977
      %1979 = vrot.lane.b32.xlu0 %v456, 4
      %v1980 = vpop.permute.xlu0 %1979
      %1981 = vrot.lane.b32.xlu0 %v554, 4
      %v1982 = vpop.permute.xlu0 %1981
      %1983 = vrot.lane.b32.xlu0 %v652, 4
      %v1984 = vpop.permute.xlu0 %1983
      %1985 = vrot.lane.b32.xlu0 %v750, 4
      %v1986 = vpop.permute.xlu0 %1985
      %1987 = vrot.lane.b32.xlu0 %v848, 4
      %v1988 = vpop.permute.xlu0 %1987
      %1989 = vrot.lane.b32.xlu0 %v946, 4
      %v1990 = vpop.permute.xlu0 %1989
      %1991 = vrot.lane.b32.xlu0 %v1044, 4
      %v1992 = vpop.permute.xlu0 %1991
      %1993 = vrot.lane.b32.xlu0 %v1142, 4
      %v1994 = vpop.permute.xlu0 %1993
      %1995 = vrot.lane.b32.xlu0 %v1240, 4
      %v1996 = vpop.permute.xlu0 %1995
      %1997 = vrot.lane.b32.xlu0 %v1338, 4
      %v1998 = vpop.permute.xlu0 %1997
      %1999 = vrot.lane.b32.xlu0 %v1436, 4
      %v2000 = vpop.permute.xlu0 %1999
      %2001 = vrot.lane.b32.xlu0 %v1534, 4
      %v2002 = vpop.permute.xlu0 %2001
      %2003 = vrot.lane.b32.xlu0 %v1632, 4
      %v2004 = vpop.permute.xlu0 %2003
      %2005 = vrot.lane.b32.xlu0 %v1730, 4
      %v2006 = vpop.permute.xlu0 %2005
      %2007 = vrot.lane.b32.xlu0 %v1828, 4
      %v2008 = vpop.permute.xlu0 %2007
      %2041 = vrot.lane.b32.xlu0 %v375, 6
      %v2042 = vpop.permute.xlu0 %2041
      %2043 = vrot.lane.b32.xlu0 %v473, 6
      %v2044 = vpop.permute.xlu0 %2043
      %2045 = vrot.lane.b32.xlu0 %v571, 6
      %v2046 = vpop.permute.xlu0 %2045
      %2047 = vrot.lane.b32.xlu0 %v669, 6
      %v2048 = vpop.permute.xlu0 %2047
      %2049 = vrot.lane.b32.xlu0 %v767, 6
      %v2050 = vpop.permute.xlu0 %2049
      %2051 = vrot.lane.b32.xlu0 %v865, 6
      %v2052 = vpop.permute.xlu0 %2051
      %2053 = vrot.lane.b32.xlu0 %v963, 6
      %v2054 = vpop.permute.xlu0 %2053
      %2055 = vrot.lane.b32.xlu0 %v1061, 6
      %v2056 = vpop.permute.xlu0 %2055
      %2057 = vrot.lane.b32.xlu0 %v1159, 6
      %v2058 = vpop.permute.xlu0 %2057
      %2059 = vrot.lane.b32.xlu0 %v1257, 6
      %v2060 = vpop.permute.xlu0 %2059
      %2061 = vrot.lane.b32.xlu0 %v1355, 6
      %v2062 = vpop.permute.xlu0 %2061
      %2063 = vrot.lane.b32.xlu0 %v1453, 6
      %v2064 = vpop.permute.xlu0 %2063
      %2065 = vrot.lane.b32.xlu0 %v1551, 6
      %v2066 = vpop.permute.xlu0 %2065
      %2067 = vrot.lane.b32.xlu0 %v1649, 6
      %v2068 = vpop.permute.xlu0 %2067
      %2069 = vrot.lane.b32.xlu0 %v1747, 6
      %v2070 = vpop.permute.xlu0 %2069
      %2071 = vrot.lane.b32.xlu0 %v1845, 6
      %v2072 = vpop.permute.xlu0 %2071
      %2105 = vrot.lane.b32.xlu0 %v366, 8
      %v2106 = vpop.permute.xlu0 %2105
      %2107 = vrot.lane.b32.xlu0 %v464, 8
      %v2108 = vpop.permute.xlu0 %2107
      %2109 = vrot.lane.b32.xlu0 %v562, 8
      %v2110 = vpop.permute.xlu0 %2109
      %2111 = vrot.lane.b32.xlu0 %v660, 8
      %v2112 = vpop.permute.xlu0 %2111
      %2113 = vrot.lane.b32.xlu0 %v758, 8
      %v2114 = vpop.permute.xlu0 %2113
      %2115 = vrot.lane.b32.xlu0 %v856, 8
      %v2116 = vpop.permute.xlu0 %2115
      %2117 = vrot.lane.b32.xlu0 %v954, 8
      %v2118 = vpop.permute.xlu0 %2117
      %2119 = vrot.lane.b32.xlu0 %v1052, 8
      %v2120 = vpop.permute.xlu0 %2119
      %2121 = vrot.lane.b32.xlu0 %v1150, 8
      %v2122 = vpop.permute.xlu0 %2121
      %2123 = vrot.lane.b32.xlu0 %v1248, 8
      %v2124 = vpop.permute.xlu0 %2123
      %2125 = vrot.lane.b32.xlu0 %v1346, 8
      %v2126 = vpop.permute.xlu0 %2125
      %2127 = vrot.lane.b32.xlu0 %v1444, 8
      %v2128 = vpop.permute.xlu0 %2127
      %2129 = vrot.lane.b32.xlu0 %v1542, 8
      %v2130 = vpop.permute.xlu0 %2129
      %2131 = vrot.lane.b32.xlu0 %v1640, 8
      %v2132 = vpop.permute.xlu0 %2131
      %2133 = vrot.lane.b32.xlu0 %v1738, 8
      %v2134 = vpop.permute.xlu0 %2133
      %2135 = vrot.lane.b32.xlu0 %v1836, 8
      %v2136 = vpop.permute.xlu0 %2135
      %2169 = vrot.lane.b32.xlu0 %v376, 10
      %v2170 = vpop.permute.xlu0 %2169
      %2171 = vrot.lane.b32.xlu0 %v474, 10
      %v2172 = vpop.permute.xlu0 %2171
      %2173 = vrot.lane.b32.xlu0 %v572, 10
      %v2174 = vpop.permute.xlu0 %2173
      %2175 = vrot.lane.b32.xlu0 %v670, 10
      %v2176 = vpop.permute.xlu0 %2175
      %2177 = vrot.lane.b32.xlu0 %v768, 10
      %v2178 = vpop.permute.xlu0 %2177
      %2179 = vrot.lane.b32.xlu0 %v866, 10
      %v2180 = vpop.permute.xlu0 %2179
      %2181 = vrot.lane.b32.xlu0 %v964, 10
      %v2182 = vpop.permute.xlu0 %2181
      %2183 = vrot.lane.b32.xlu0 %v1062, 10
      %v2184 = vpop.permute.xlu0 %2183
      %2185 = vrot.lane.b32.xlu0 %v1160, 10
      %v2186 = vpop.permute.xlu0 %2185
      %2187 = vrot.lane.b32.xlu0 %v1258, 10
      %v2188 = vpop.permute.xlu0 %2187
      %2189 = vrot.lane.b32.xlu0 %v1356, 10
      %v2190 = vpop.permute.xlu0 %2189
      %2191 = vrot.lane.b32.xlu0 %v1454, 10
      %v2192 = vpop.permute.xlu0 %2191
      %2193 = vrot.lane.b32.xlu0 %v1552, 10
      %v2194 = vpop.permute.xlu0 %2193
      %2195 = vrot.lane.b32.xlu0 %v1650, 10
      %v2196 = vpop.permute.xlu0 %2195
      %2197 = vrot.lane.b32.xlu0 %v1748, 10
      %v2198 = vpop.permute.xlu0 %2197
      %2199 = vrot.lane.b32.xlu0 %v1846, 10
      %v2200 = vpop.permute.xlu0 %2199
      %2233 = vrot.lane.b32.xlu0 %v373, 12
      %v2234 = vpop.permute.xlu0 %2233
      %2235 = vrot.lane.b32.xlu0 %v471, 12
      %v2236 = vpop.permute.xlu0 %2235
      %2237 = vrot.lane.b32.xlu0 %v569, 12
      %v2238 = vpop.permute.xlu0 %2237
      %2239 = vrot.lane.b32.xlu0 %v667, 12
      %v2240 = vpop.permute.xlu0 %2239
      %2241 = vrot.lane.b32.xlu0 %v765, 12
      %v2242 = vpop.permute.xlu0 %2241
      %2243 = vrot.lane.b32.xlu0 %v863, 12
      %v2244 = vpop.permute.xlu0 %2243
      %2245 = vrot.lane.b32.xlu0 %v961, 12
      %v2246 = vpop.permute.xlu0 %2245
      %2247 = vrot.lane.b32.xlu0 %v1059, 12
      %v2248 = vpop.permute.xlu0 %2247
      %2249 = vrot.lane.b32.xlu0 %v1157, 12
      %v2250 = vpop.permute.xlu0 %2249
      %2251 = vrot.lane.b32.xlu0 %v1255, 12
      %v2252 = vpop.permute.xlu0 %2251
      %2253 = vrot.lane.b32.xlu0 %v1353, 12
      %v2254 = vpop.permute.xlu0 %2253
      %2255 = vrot.lane.b32.xlu0 %v1451, 12
      %v2256 = vpop.permute.xlu0 %2255
      %2257 = vrot.lane.b32.xlu0 %v1549, 12
      %v2258 = vpop.permute.xlu0 %2257
      %2259 = vrot.lane.b32.xlu0 %v1647, 12
      %v2260 = vpop.permute.xlu0 %2259
      %2261 = vrot.lane.b32.xlu0 %v1745, 12
      %v2262 = vpop.permute.xlu0 %2261
      %2263 = vrot.lane.b32.xlu0 %v1843, 12
      %v2264 = vpop.permute.xlu0 %2263
      %2297 = vrot.lane.b32.xlu0 %v377, 14
      %v2298 = vpop.permute.xlu0 %2297
      %2299 = vrot.lane.b32.xlu0 %v475, 14
      %v2300 = vpop.permute.xlu0 %2299
      %2301 = vrot.lane.b32.xlu0 %v573, 14
      %v2302 = vpop.permute.xlu0 %2301
      %2303 = vrot.lane.b32.xlu0 %v671, 14
      %v2304 = vpop.permute.xlu0 %2303
      %2305 = vrot.lane.b32.xlu0 %v769, 14
      %v2306 = vpop.permute.xlu0 %2305
      %2307 = vrot.lane.b32.xlu0 %v867, 14
      %v2308 = vpop.permute.xlu0 %2307
      %2309 = vrot.lane.b32.xlu0 %v965, 14
      %v2310 = vpop.permute.xlu0 %2309
      %2311 = vrot.lane.b32.xlu0 %v1063, 14
      %v2312 = vpop.permute.xlu0 %2311
      %2313 = vrot.lane.b32.xlu0 %v1161, 14
      %v2314 = vpop.permute.xlu0 %2313
      %2315 = vrot.lane.b32.xlu0 %v1259, 14
      %v2316 = vpop.permute.xlu0 %2315
      %2317 = vrot.lane.b32.xlu0 %v1357, 14
      %v2318 = vpop.permute.xlu0 %2317
      %2319 = vrot.lane.b32.xlu0 %v1455, 14
      %v2320 = vpop.permute.xlu0 %2319
      %2321 = vrot.lane.b32.xlu0 %v1553, 14
      %v2322 = vpop.permute.xlu0 %2321
      %2323 = vrot.lane.b32.xlu0 %v1651, 14
      %v2324 = vpop.permute.xlu0 %2323
      %2325 = vrot.lane.b32.xlu0 %v1749, 14
      %v2326 = vpop.permute.xlu0 %2325
      %2327 = vrot.lane.b32.xlu0 %v1847, 14
      %v2328 = vpop.permute.xlu0 %2327
      %2361 = vrot.lane.b32.xlu0 %v400, 16
      %v2362 = vpop.permute.xlu0 %2361
      %2363 = vrot.lane.b32.xlu0 %v498, 16
      %v2364 = vpop.permute.xlu0 %2363
      %2365 = vrot.lane.b32.xlu0 %v596, 16
      %v2366 = vpop.permute.xlu0 %2365
      %2367 = vrot.lane.b32.xlu0 %v694, 16
      %v2368 = vpop.permute.xlu0 %2367
      %2369 = vrot.lane.b32.xlu0 %v792, 16
      %v2370 = vpop.permute.xlu0 %2369
      %2371 = vrot.lane.b32.xlu0 %v890, 16
      %v2372 = vpop.permute.xlu0 %2371
      %2373 = vrot.lane.b32.xlu0 %v988, 16
      %v2374 = vpop.permute.xlu0 %2373
      %2375 = vrot.lane.b32.xlu0 %v1086, 16
      %v2376 = vpop.permute.xlu0 %2375
      %2377 = vrot.lane.b32.xlu0 %v1184, 16
      %v2378 = vpop.permute.xlu0 %2377
      %2379 = vrot.lane.b32.xlu0 %v1282, 16
      %v2380 = vpop.permute.xlu0 %2379
      %2381 = vrot.lane.b32.xlu0 %v1380, 16
      %v2382 = vpop.permute.xlu0 %2381
      %2383 = vrot.lane.b32.xlu0 %v1478, 16
      %v2384 = vpop.permute.xlu0 %2383
      %2385 = vrot.lane.b32.xlu0 %v1576, 16
      %v2386 = vpop.permute.xlu0 %2385
      %2387 = vrot.lane.b32.xlu0 %v1674, 16
      %v2388 = vpop.permute.xlu0 %2387
      %2389 = vrot.lane.b32.xlu0 %v1772, 16
      %v2390 = vpop.permute.xlu0 %2389
      %2391 = vrot.lane.b32.xlu0 %v1870, 16
      %v2392 = vpop.permute.xlu0 %2391
      %2425 = vrot.lane.b32.xlu0 %v423, 18
      %v2426 = vpop.permute.xlu0 %2425
      %2427 = vrot.lane.b32.xlu0 %v521, 18
      %v2428 = vpop.permute.xlu0 %2427
      %2429 = vrot.lane.b32.xlu0 %v619, 18
      %v2430 = vpop.permute.xlu0 %2429
      %2431 = vrot.lane.b32.xlu0 %v717, 18
      %v2432 = vpop.permute.xlu0 %2431
      %2433 = vrot.lane.b32.xlu0 %v815, 18
      %v2434 = vpop.permute.xlu0 %2433
      %2435 = vrot.lane.b32.xlu0 %v913, 18
      %v2436 = vpop.permute.xlu0 %2435
      %2437 = vrot.lane.b32.xlu0 %v1011, 18
      %v2438 = vpop.permute.xlu0 %2437
      %2439 = vrot.lane.b32.xlu0 %v1109, 18
      %v2440 = vpop.permute.xlu0 %2439
      %2441 = vrot.lane.b32.xlu0 %v1207, 18
      %v2442 = vpop.permute.xlu0 %2441
      %2443 = vrot.lane.b32.xlu0 %v1305, 18
      %v2444 = vpop.permute.xlu0 %2443
      %2445 = vrot.lane.b32.xlu0 %v1403, 18
      %v2446 = vpop.permute.xlu0 %2445
      %2447 = vrot.lane.b32.xlu0 %v1501, 18
      %v2448 = vpop.permute.xlu0 %2447
      %2449 = vrot.lane.b32.xlu0 %v1599, 18
      %v2450 = vpop.permute.xlu0 %2449
      %2451 = vrot.lane.b32.xlu0 %v1697, 18
      %v2452 = vpop.permute.xlu0 %2451
      %2453 = vrot.lane.b32.xlu0 %v1795, 18
      %v2454 = vpop.permute.xlu0 %2453
      %2455 = vrot.lane.b32.xlu0 %v1893, 18
      %v2456 = vpop.permute.xlu0 %2455
      %2489 = vrot.lane.b32.xlu0 %v407, 20
      %v2490 = vpop.permute.xlu0 %2489
      %2491 = vrot.lane.b32.xlu0 %v505, 20
      %v2492 = vpop.permute.xlu0 %2491
      %2493 = vrot.lane.b32.xlu0 %v603, 20
      %v2494 = vpop.permute.xlu0 %2493
      %2495 = vrot.lane.b32.xlu0 %v701, 20
      %v2496 = vpop.permute.xlu0 %2495
      %2497 = vrot.lane.b32.xlu0 %v799, 20
      %v2498 = vpop.permute.xlu0 %2497
      %2499 = vrot.lane.b32.xlu0 %v897, 20
      %v2500 = vpop.permute.xlu0 %2499
      %2501 = vrot.lane.b32.xlu0 %v995, 20
      %v2502 = vpop.permute.xlu0 %2501
      %2503 = vrot.lane.b32.xlu0 %v1093, 20
      %v2504 = vpop.permute.xlu0 %2503
      %2505 = vrot.lane.b32.xlu0 %v1191, 20
      %v2506 = vpop.permute.xlu0 %2505
      %2507 = vrot.lane.b32.xlu0 %v1289, 20
      %v2508 = vpop.permute.xlu0 %2507
      %2509 = vrot.lane.b32.xlu0 %v1387, 20
      %v2510 = vpop.permute.xlu0 %2509
      %2511 = vrot.lane.b32.xlu0 %v1485, 20
      %v2512 = vpop.permute.xlu0 %2511
      %2513 = vrot.lane.b32.xlu0 %v1583, 20
      %v2514 = vpop.permute.xlu0 %2513
      %2515 = vrot.lane.b32.xlu0 %v1681, 20
      %v2516 = vpop.permute.xlu0 %2515
      %2517 = vrot.lane.b32.xlu0 %v1779, 20
      %v2518 = vpop.permute.xlu0 %2517
      %2519 = vrot.lane.b32.xlu0 %v1877, 20
      %v2520 = vpop.permute.xlu0 %2519
      %2553 = vrot.lane.b32.xlu0 %v424, 22
      %v2554 = vpop.permute.xlu0 %2553
      %2555 = vrot.lane.b32.xlu0 %v522, 22
      %v2556 = vpop.permute.xlu0 %2555
      %2557 = vrot.lane.b32.xlu0 %v620, 22
      %v2558 = vpop.permute.xlu0 %2557
      %2559 = vrot.lane.b32.xlu0 %v718, 22
      %v2560 = vpop.permute.xlu0 %2559
      %2561 = vrot.lane.b32.xlu0 %v816, 22
      %v2562 = vpop.permute.xlu0 %2561
      %2563 = vrot.lane.b32.xlu0 %v914, 22
      %v2564 = vpop.permute.xlu0 %2563
      %2565 = vrot.lane.b32.xlu0 %v1012, 22
      %v2566 = vpop.permute.xlu0 %2565
      %2567 = vrot.lane.b32.xlu0 %v1110, 22
      %v2568 = vpop.permute.xlu0 %2567
      %2569 = vrot.lane.b32.xlu0 %v1208, 22
      %v2570 = vpop.permute.xlu0 %2569
      %2571 = vrot.lane.b32.xlu0 %v1306, 22
      %v2572 = vpop.permute.xlu0 %2571
      %2573 = vrot.lane.b32.xlu0 %v1404, 22
      %v2574 = vpop.permute.xlu0 %2573
      %2575 = vrot.lane.b32.xlu0 %v1502, 22
      %v2576 = vpop.permute.xlu0 %2575
      %2577 = vrot.lane.b32.xlu0 %v1600, 22
      %v2578 = vpop.permute.xlu0 %2577
      %2579 = vrot.lane.b32.xlu0 %v1698, 22
      %v2580 = vpop.permute.xlu0 %2579
      %2581 = vrot.lane.b32.xlu0 %v1796, 22
      %v2582 = vpop.permute.xlu0 %2581
      %2583 = vrot.lane.b32.xlu0 %v1894, 22
      %v2584 = vpop.permute.xlu0 %2583
      %2617 = vrot.lane.b32.xlu0 %v415, 24
      %v2618 = vpop.permute.xlu0 %2617
      %2619 = vrot.lane.b32.xlu0 %v513, 24
      %v2620 = vpop.permute.xlu0 %2619
      %2621 = vrot.lane.b32.xlu0 %v611, 24
      %v2622 = vpop.permute.xlu0 %2621
      %2623 = vrot.lane.b32.xlu0 %v709, 24
      %v2624 = vpop.permute.xlu0 %2623
      %2625 = vrot.lane.b32.xlu0 %v807, 24
      %v2626 = vpop.permute.xlu0 %2625
      %2627 = vrot.lane.b32.xlu0 %v905, 24
      %v2628 = vpop.permute.xlu0 %2627
      %2629 = vrot.lane.b32.xlu0 %v1003, 24
      %v2630 = vpop.permute.xlu0 %2629
      %2631 = vrot.lane.b32.xlu0 %v1101, 24
      %v2632 = vpop.permute.xlu0 %2631
      %2633 = vrot.lane.b32.xlu0 %v1199, 24
      %v2634 = vpop.permute.xlu0 %2633
      %2635 = vrot.lane.b32.xlu0 %v1297, 24
      %v2636 = vpop.permute.xlu0 %2635
      %2637 = vrot.lane.b32.xlu0 %v1395, 24
      %v2638 = vpop.permute.xlu0 %2637
      %2639 = vrot.lane.b32.xlu0 %v1493, 24
      %v2640 = vpop.permute.xlu0 %2639
      %2641 = vrot.lane.b32.xlu0 %v1591, 24
      %v2642 = vpop.permute.xlu0 %2641
      %2643 = vrot.lane.b32.xlu0 %v1689, 24
      %v2644 = vpop.permute.xlu0 %2643
      %2645 = vrot.lane.b32.xlu0 %v1787, 24
      %v2646 = vpop.permute.xlu0 %2645
      %2647 = vrot.lane.b32.xlu0 %v1885, 24
      %v2648 = vpop.permute.xlu0 %2647
      %2681 = vrot.lane.b32.xlu0 %v425, 26
      %v2682 = vpop.permute.xlu0 %2681
      %2683 = vrot.lane.b32.xlu0 %v523, 26
      %v2684 = vpop.permute.xlu0 %2683
      %2685 = vrot.lane.b32.xlu0 %v621, 26
      %v2686 = vpop.permute.xlu0 %2685
      %2687 = vrot.lane.b32.xlu0 %v719, 26
      %v2688 = vpop.permute.xlu0 %2687
      %2689 = vrot.lane.b32.xlu0 %v817, 26
      %v2690 = vpop.permute.xlu0 %2689
      %2691 = vrot.lane.b32.xlu0 %v915, 26
      %v2692 = vpop.permute.xlu0 %2691
      %2693 = vrot.lane.b32.xlu0 %v1013, 26
      %v2694 = vpop.permute.xlu0 %2693
      %2695 = vrot.lane.b32.xlu0 %v1111, 26
      %v2696 = vpop.permute.xlu0 %2695
      %2697 = vrot.lane.b32.xlu0 %v1209, 26
      %v2698 = vpop.permute.xlu0 %2697
      %2699 = vrot.lane.b32.xlu0 %v1307, 26
      %v2700 = vpop.permute.xlu0 %2699
      %2701 = vrot.lane.b32.xlu0 %v1405, 26
      %v2702 = vpop.permute.xlu0 %2701
      %2703 = vrot.lane.b32.xlu0 %v1503, 26
      %v2704 = vpop.permute.xlu0 %2703
      %2705 = vrot.lane.b32.xlu0 %v1601, 26
      %v2706 = vpop.permute.xlu0 %2705
      %2707 = vrot.lane.b32.xlu0 %v1699, 26
      %v2708 = vpop.permute.xlu0 %2707
      %2709 = vrot.lane.b32.xlu0 %v1797, 26
      %v2710 = vpop.permute.xlu0 %2709
      %2711 = vrot.lane.b32.xlu0 %v1895, 26
      %v2712 = vpop.permute.xlu0 %2711
      %2745 = vrot.lane.b32.xlu0 %v422, 28
      %v2746 = vpop.permute.xlu0 %2745
      %2747 = vrot.lane.b32.xlu0 %v520, 28
      %v2748 = vpop.permute.xlu0 %2747
      %2749 = vrot.lane.b32.xlu0 %v618, 28
      %v2750 = vpop.permute.xlu0 %2749
      %2751 = vrot.lane.b32.xlu0 %v716, 28
      %v2752 = vpop.permute.xlu0 %2751
      %2753 = vrot.lane.b32.xlu0 %v814, 28
      %v2754 = vpop.permute.xlu0 %2753
      %2755 = vrot.lane.b32.xlu0 %v912, 28
      %v2756 = vpop.permute.xlu0 %2755
      %2757 = vrot.lane.b32.xlu0 %v1010, 28
      %v2758 = vpop.permute.xlu0 %2757
      %2759 = vrot.lane.b32.xlu0 %v1108, 28
      %v2760 = vpop.permute.xlu0 %2759
      %2761 = vrot.lane.b32.xlu0 %v1206, 28
      %v2762 = vpop.permute.xlu0 %2761
      %2763 = vrot.lane.b32.xlu0 %v1304, 28
      %v2764 = vpop.permute.xlu0 %2763
      %2765 = vrot.lane.b32.xlu0 %v1402, 28
      %v2766 = vpop.permute.xlu0 %2765
      %2767 = vrot.lane.b32.xlu0 %v1500, 28
      %v2768 = vpop.permute.xlu0 %2767
      %2769 = vrot.lane.b32.xlu0 %v1598, 28
      %v2770 = vpop.permute.xlu0 %2769
      %2771 = vrot.lane.b32.xlu0 %v1696, 28
      %v2772 = vpop.permute.xlu0 %2771
      %2773 = vrot.lane.b32.xlu0 %v1794, 28
      %v2774 = vpop.permute.xlu0 %2773
      %2775 = vrot.lane.b32.xlu0 %v1892, 28
      %v2776 = vpop.permute.xlu0 %2775
      %2809 = vrot.lane.b32.xlu0 %v426, 30
      %v2810 = vpop.permute.xlu0 %2809
      %2811 = vrot.lane.b32.xlu0 %v524, 30
      %v2812 = vpop.permute.xlu0 %2811
      %2813 = vrot.lane.b32.xlu0 %v622, 30
      %v2814 = vpop.permute.xlu0 %2813
      %2815 = vrot.lane.b32.xlu0 %v720, 30
      %v2816 = vpop.permute.xlu0 %2815
      %2817 = vrot.lane.b32.xlu0 %v818, 30
      %v2818 = vpop.permute.xlu0 %2817
      %2819 = vrot.lane.b32.xlu0 %v916, 30
      %v2820 = vpop.permute.xlu0 %2819
      %2821 = vrot.lane.b32.xlu0 %v1014, 30
      %v2822 = vpop.permute.xlu0 %2821
      %2823 = vrot.lane.b32.xlu0 %v1112, 30
      %v2824 = vpop.permute.xlu0 %2823
      %2825 = vrot.lane.b32.xlu0 %v1210, 30
      %v2826 = vpop.permute.xlu0 %2825
      %2827 = vrot.lane.b32.xlu0 %v1308, 30
      %v2828 = vpop.permute.xlu0 %2827
      %2829 = vrot.lane.b32.xlu0 %v1406, 30
      %v2830 = vpop.permute.xlu0 %2829
      %2831 = vrot.lane.b32.xlu0 %v1504, 30
      %v2832 = vpop.permute.xlu0 %2831
      %2833 = vrot.lane.b32.xlu0 %v1602, 30
      %v2834 = vpop.permute.xlu0 %2833
      %2835 = vrot.lane.b32.xlu0 %v1700, 30
      %v2836 = vpop.permute.xlu0 %2835
      %2837 = vrot.lane.b32.xlu0 %v1798, 30
      %v2838 = vpop.permute.xlu0 %2837
      %2839 = vrot.lane.b32.xlu0 %v1896, 30
      %v2840 = vpop.permute.xlu0 %2839
      %vm2857 = vcmask 15360
      %v2858 = vsel %vm2857, %v351, %v1914
      %v2859 = vsel %vm2857, %v449, %v1916
      %v2860 = vsel %vm2857, %v547, %v1918
      %v2861 = vsel %vm2857, %v645, %v1920
      %v2862 = vsel %vm2857, %v743, %v1922
      %v2863 = vsel %vm2857, %v841, %v1924
      %v2864 = vsel %vm2857, %v939, %v1926
      %v2865 = vsel %vm2857, %v1037, %v1928
      %v2866 = vsel %vm2857, %v1135, %v1930
      %v2867 = vsel %vm2857, %v1233, %v1932
      %v2868 = vsel %vm2857, %v1331, %v1934
      %v2869 = vsel %vm2857, %v1429, %v1936
      %v2870 = vsel %vm2857, %v1527, %v1938
      %v2871 = vsel %vm2857, %v1625, %v1940
      %v2872 = vsel %vm2857, %v1723, %v1942
      %v2873 = vsel %vm2857, %v1821, %v1944
      %vm2874 = vcmask 31744
      %v2875 = vsel %vm2874, %v2858, %v1978
      %v2876 = vsel %vm2874, %v2859, %v1980
      %v2877 = vsel %vm2874, %v2860, %v1982
      %v2878 = vsel %vm2874, %v2861, %v1984
      %v2879 = vsel %vm2874, %v2862, %v1986
      %v2880 = vsel %vm2874, %v2863, %v1988
      %v2881 = vsel %vm2874, %v2864, %v1990
      %v2882 = vsel %vm2874, %v2865, %v1992
      %v2883 = vsel %vm2874, %v2866, %v1994
      %v2884 = vsel %vm2874, %v2867, %v1996
      %v2885 = vsel %vm2874, %v2868, %v1998
      %v2886 = vsel %vm2874, %v2869, %v2000
      %v2887 = vsel %vm2874, %v2870, %v2002
      %v2888 = vsel %vm2874, %v2871, %v2004
      %v2889 = vsel %vm2874, %v2872, %v2006
      %v2890 = vsel %vm2874, %v2873, %v2008
      %vm2891 = vcmask 48128
      %v2892 = vsel %vm2891, %v2875, %v2042
      %v2893 = vsel %vm2891, %v2876, %v2044
      %v2894 = vsel %vm2891, %v2877, %v2046
      %v2895 = vsel %vm2891, %v2878, %v2048
      %v2896 = vsel %vm2891, %v2879, %v2050
      %v2897 = vsel %vm2891, %v2880, %v2052
      %v2898 = vsel %vm2891, %v2881, %v2054
      %v2899 = vsel %vm2891, %v2882, %v2056
      %v2900 = vsel %vm2891, %v2883, %v2058
      %v2901 = vsel %vm2891, %v2884, %v2060
      %v2902 = vsel %vm2891, %v2885, %v2062
      %v2903 = vsel %vm2891, %v2886, %v2064
      %v2904 = vsel %vm2891, %v2887, %v2066
      %v2905 = vsel %vm2891, %v2888, %v2068
      %v2906 = vsel %vm2891, %v2889, %v2070
      %v2907 = vsel %vm2891, %v2890, %v2072
      %vm2908 = vcmask 64512
      %v2909 = vsel %vm2908, %v2892, %v2106
      %v2910 = vsel %vm2908, %v2893, %v2108
      %v2911 = vsel %vm2908, %v2894, %v2110
      %v2912 = vsel %vm2908, %v2895, %v2112
      %v2913 = vsel %vm2908, %v2896, %v2114
      %v2914 = vsel %vm2908, %v2897, %v2116
      %v2915 = vsel %vm2908, %v2898, %v2118
      %v2916 = vsel %vm2908, %v2899, %v2120
      %v2917 = vsel %vm2908, %v2900, %v2122
      %v2918 = vsel %vm2908, %v2901, %v2124
      %v2919 = vsel %vm2908, %v2902, %v2126
      %v2920 = vsel %vm2908, %v2903, %v2128
      %v2921 = vsel %vm2908, %v2904, %v2130
      %v2922 = vsel %vm2908, %v2905, %v2132
      %v2923 = vsel %vm2908, %v2906, %v2134
      %v2924 = vsel %vm2908, %v2907, %v2136
      %vm2925 = vcmask 80896
      %v2926 = vsel %vm2925, %v2909, %v2170
      %v2927 = vsel %vm2925, %v2910, %v2172
      %v2928 = vsel %vm2925, %v2911, %v2174
      %v2929 = vsel %vm2925, %v2912, %v2176
      %v2930 = vsel %vm2925, %v2913, %v2178
      %v2931 = vsel %vm2925, %v2914, %v2180
      %v2932 = vsel %vm2925, %v2915, %v2182
      %v2933 = vsel %vm2925, %v2916, %v2184
      %v2934 = vsel %vm2925, %v2917, %v2186
      %v2935 = vsel %vm2925, %v2918, %v2188
      %v2936 = vsel %vm2925, %v2919, %v2190
      %v2937 = vsel %vm2925, %v2920, %v2192
      %v2938 = vsel %vm2925, %v2921, %v2194
      %v2939 = vsel %vm2925, %v2922, %v2196
      %v2940 = vsel %vm2925, %v2923, %v2198
      %v2941 = vsel %vm2925, %v2924, %v2200
      %vm2942 = vcmask 97280
      %v2943 = vsel %vm2942, %v2926, %v2234
      %v2944 = vsel %vm2942, %v2927, %v2236
      %v2945 = vsel %vm2942, %v2928, %v2238
      %v2946 = vsel %vm2942, %v2929, %v2240
      %v2947 = vsel %vm2942, %v2930, %v2242
      %v2948 = vsel %vm2942, %v2931, %v2244
      %v2949 = vsel %vm2942, %v2932, %v2246
      %v2950 = vsel %vm2942, %v2933, %v2248
      %v2951 = vsel %vm2942, %v2934, %v2250
      %v2952 = vsel %vm2942, %v2935, %v2252
      %v2953 = vsel %vm2942, %v2936, %v2254
      %v2954 = vsel %vm2942, %v2937, %v2256
      %v2955 = vsel %vm2942, %v2938, %v2258
      %v2956 = vsel %vm2942, %v2939, %v2260
      %v2957 = vsel %vm2942, %v2940, %v2262
      %v2958 = vsel %vm2942, %v2941, %v2264
      %vm2959 = vcmask 113664
      %v2960 = vsel %vm2959, %v2943, %v2298
      %v2961 = vsel %vm2959, %v2944, %v2300
      %v2962 = vsel %vm2959, %v2945, %v2302
      %v2963 = vsel %vm2959, %v2946, %v2304
      %v2964 = vsel %vm2959, %v2947, %v2306
      %v2965 = vsel %vm2959, %v2948, %v2308
      %v2966 = vsel %vm2959, %v2949, %v2310
      %v2967 = vsel %vm2959, %v2950, %v2312
      %v2968 = vsel %vm2959, %v2951, %v2314
      %v2969 = vsel %vm2959, %v2952, %v2316
      %v2970 = vsel %vm2959, %v2953, %v2318
      %v2971 = vsel %vm2959, %v2954, %v2320
      %v2972 = vsel %vm2959, %v2955, %v2322
      %v2973 = vsel %vm2959, %v2956, %v2324
      %v2974 = vsel %vm2959, %v2957, %v2326
      %v2975 = vsel %vm2959, %v2958, %v2328
      %vm2976 = vcmask 130048
      %v2977 = vsel %vm2976, %v2960, %v2362
      %v2978 = vsel %vm2976, %v2961, %v2364
      %v2979 = vsel %vm2976, %v2962, %v2366
      %v2980 = vsel %vm2976, %v2963, %v2368
      %v2981 = vsel %vm2976, %v2964, %v2370
      %v2982 = vsel %vm2976, %v2965, %v2372
      %v2983 = vsel %vm2976, %v2966, %v2374
      %v2984 = vsel %vm2976, %v2967, %v2376
      %v2985 = vsel %vm2976, %v2968, %v2378
      %v2986 = vsel %vm2976, %v2969, %v2380
      %v2987 = vsel %vm2976, %v2970, %v2382
      %v2988 = vsel %vm2976, %v2971, %v2384
      %v2989 = vsel %vm2976, %v2972, %v2386
      %v2990 = vsel %vm2976, %v2973, %v2388
      %v2991 = vsel %vm2976, %v2974, %v2390
      %v2992 = vsel %vm2976, %v2975, %v2392
      %vm2993 = vcmask 146432
      %v2994 = vsel %vm2993, %v2977, %v2426
      %v2995 = vsel %vm2993, %v2978, %v2428
      %v2996 = vsel %vm2993, %v2979, %v2430
      %v2997 = vsel %vm2993, %v2980, %v2432
      %v2998 = vsel %vm2993, %v2981, %v2434
      %v2999 = vsel %vm2993, %v2982, %v2436
      %v3000 = vsel %vm2993, %v2983, %v2438
      %v3001 = vsel %vm2993, %v2984, %v2440
      %v3002 = vsel %vm2993, %v2985, %v2442
      %v3003 = vsel %vm2993, %v2986, %v2444
      %v3004 = vsel %vm2993, %v2987, %v2446
      %v3005 = vsel %vm2993, %v2988, %v2448
      %v3006 = vsel %vm2993, %v2989, %v2450
      %v3007 = vsel %vm2993, %v2990, %v2452
      %v3008 = vsel %vm2993, %v2991, %v2454
      %v3009 = vsel %vm2993, %v2992, %v2456
      %vm3010 = vcmask 162816
      %v3011 = vsel %vm3010, %v2994, %v2490
      %v3012 = vsel %vm3010, %v2995, %v2492
      %v3013 = vsel %vm3010, %v2996, %v2494
      %v3014 = vsel %vm3010, %v2997, %v2496
      %v3015 = vsel %vm3010, %v2998, %v2498
      %v3016 = vsel %vm3010, %v2999, %v2500
      %v3017 = vsel %vm3010, %v3000, %v2502
      %v3018 = vsel %vm3010, %v3001, %v2504
      %v3019 = vsel %vm3010, %v3002, %v2506
      %v3020 = vsel %vm3010, %v3003, %v2508
      %v3021 = vsel %vm3010, %v3004, %v2510
      %v3022 = vsel %vm3010, %v3005, %v2512
      %v3023 = vsel %vm3010, %v3006, %v2514
      %v3024 = vsel %vm3010, %v3007, %v2516
      %v3025 = vsel %vm3010, %v3008, %v2518
      %v3026 = vsel %vm3010, %v3009, %v2520
      %vm3027 = vcmask 179200
      %v3028 = vsel %vm3027, %v3011, %v2554
      %v3029 = vsel %vm3027, %v3012, %v2556
      %v3030 = vsel %vm3027, %v3013, %v2558
      %v3031 = vsel %vm3027, %v3014, %v2560
      %v3032 = vsel %vm3027, %v3015, %v2562
      %v3033 = vsel %vm3027, %v3016, %v2564
      %v3034 = vsel %vm3027, %v3017, %v2566
      %v3035 = vsel %vm3027, %v3018, %v2568
      %v3036 = vsel %vm3027, %v3019, %v2570
      %v3037 = vsel %vm3027, %v3020, %v2572
      %v3038 = vsel %vm3027, %v3021, %v2574
      %v3039 = vsel %vm3027, %v3022, %v2576
      %v3040 = vsel %vm3027, %v3023, %v2578
      %v3041 = vsel %vm3027, %v3024, %v2580
      %v3042 = vsel %vm3027, %v3025, %v2582
      %v3043 = vsel %vm3027, %v3026, %v2584
      %vm3044 = vcmask 195584
      %v3045 = vsel %vm3044, %v3028, %v2618
      %v3046 = vsel %vm3044, %v3029, %v2620
      %v3047 = vsel %vm3044, %v3030, %v2622
      %v3048 = vsel %vm3044, %v3031, %v2624
      %v3049 = vsel %vm3044, %v3032, %v2626
      %v3050 = vsel %vm3044, %v3033, %v2628
      %v3051 = vsel %vm3044, %v3034, %v2630
      %v3052 = vsel %vm3044, %v3035, %v2632
      %v3053 = vsel %vm3044, %v3036, %v2634
      %v3054 = vsel %vm3044, %v3037, %v2636
      %v3055 = vsel %vm3044, %v3038, %v2638
      %v3056 = vsel %vm3044, %v3039, %v2640
      %v3057 = vsel %vm3044, %v3040, %v2642
      %v3058 = vsel %vm3044, %v3041, %v2644
      %v3059 = vsel %vm3044, %v3042, %v2646
      %v3060 = vsel %vm3044, %v3043, %v2648
      %vm3061 = vcmask 211968
      %v3062 = vsel %vm3061, %v3045, %v2682
      %v3063 = vsel %vm3061, %v3046, %v2684
      %v3064 = vsel %vm3061, %v3047, %v2686
      %v3065 = vsel %vm3061, %v3048, %v2688
      %v3066 = vsel %vm3061, %v3049, %v2690
      %v3067 = vsel %vm3061, %v3050, %v2692
      %v3068 = vsel %vm3061, %v3051, %v2694
      %v3069 = vsel %vm3061, %v3052, %v2696
      %v3070 = vsel %vm3061, %v3053, %v2698
      %v3071 = vsel %vm3061, %v3054, %v2700
      %v3072 = vsel %vm3061, %v3055, %v2702
      %v3073 = vsel %vm3061, %v3056, %v2704
      %v3074 = vsel %vm3061, %v3057, %v2706
      %v3075 = vsel %vm3061, %v3058, %v2708
      %v3076 = vsel %vm3061, %v3059, %v2710
      %v3077 = vsel %vm3061, %v3060, %v2712
      %vm3078 = vcmask 228352
      %v3079 = vsel %vm3078, %v3062, %v2746
      %v3080 = vsel %vm3078, %v3063, %v2748
      %v3081 = vsel %vm3078, %v3064, %v2750
      %v3082 = vsel %vm3078, %v3065, %v2752
      %v3083 = vsel %vm3078, %v3066, %v2754
      %v3084 = vsel %vm3078, %v3067, %v2756
      %v3085 = vsel %vm3078, %v3068, %v2758
      %v3086 = vsel %vm3078, %v3069, %v2760
      %v3087 = vsel %vm3078, %v3070, %v2762
      %v3088 = vsel %vm3078, %v3071, %v2764
      %v3089 = vsel %vm3078, %v3072, %v2766
      %v3090 = vsel %vm3078, %v3073, %v2768
      %v3091 = vsel %vm3078, %v3074, %v2770
      %v3092 = vsel %vm3078, %v3075, %v2772
      %v3093 = vsel %vm3078, %v3076, %v2774
      %v3094 = vsel %vm3078, %v3077, %v2776
      %vm3095 = vcmask 244736
      %v3096 = vsel %vm3095, %v3079, %v2810
      %v3097 = vsel %vm3095, %v3080, %v2812
      %v3098 = vsel %vm3095, %v3081, %v2814
      %v3099 = vsel %vm3095, %v3082, %v2816
      %v3100 = vsel %vm3095, %v3083, %v2818
      %v3101 = vsel %vm3095, %v3084, %v2820
      %v3102 = vsel %vm3095, %v3085, %v2822
      %v3103 = vsel %vm3095, %v3086, %v2824
      %v3104 = vsel %vm3095, %v3087, %v2826
      %v3105 = vsel %vm3095, %v3088, %v2828
      %v3106 = vsel %vm3095, %v3089, %v2830
      %v3107 = vsel %vm3095, %v3090, %v2832
      %v3108 = vsel %vm3095, %v3091, %v2834
      %v3109 = vsel %vm3095, %v3092, %v2836
      %v3110 = vsel %vm3095, %v3093, %v2838
      %v3111 = vsel %vm3095, %v3094, %v2840
      %v3112 = vlaneseq
      %v3113 = vshrl.u32 %v3112, 7
      %v3114 = vsub.s32 0, %v3113
      %v3115 = vrot.slane %v3096, %v3114
      %v3116 = vlaneseq
      %v3117 = vshrl.u32 %v3116, 7
      %v3118 = vsub.s32 0, %v3117
      %v3119 = vrot.slane %v3097, %v3118
      %v3120 = vlaneseq
      %v3121 = vshrl.u32 %v3120, 7
      %v3122 = vsub.s32 0, %v3121
      %v3123 = vrot.slane %v3098, %v3122
      %v3124 = vlaneseq
      %v3125 = vshrl.u32 %v3124, 7
      %v3126 = vsub.s32 0, %v3125
      %v3127 = vrot.slane %v3099, %v3126
      %v3128 = vlaneseq
      %v3129 = vshrl.u32 %v3128, 7
      %v3130 = vsub.s32 0, %v3129
      %v3131 = vrot.slane %v3100, %v3130
      %v3132 = vlaneseq
      %v3133 = vshrl.u32 %v3132, 7
      %v3134 = vsub.s32 0, %v3133
      %v3135 = vrot.slane %v3101, %v3134
      %v3136 = vlaneseq
      %v3137 = vshrl.u32 %v3136, 7
      %v3138 = vsub.s32 0, %v3137
      %v3139 = vrot.slane %v3102, %v3138
      %v3140 = vlaneseq
      %v3141 = vshrl.u32 %v3140, 7
      %v3142 = vsub.s32 0, %v3141
      %v3143 = vrot.slane %v3103, %v3142
      %v3144 = vlaneseq
      %v3145 = vshrl.u32 %v3144, 7
      %v3146 = vsub.s32 0, %v3145
      %v3147 = vrot.slane %v3104, %v3146
      %v3148 = vlaneseq
      %v3149 = vshrl.u32 %v3148, 7
      %v3150 = vsub.s32 0, %v3149
      %v3151 = vrot.slane %v3105, %v3150
      %v3152 = vlaneseq
      %v3153 = vshrl.u32 %v3152, 7
      %v3154 = vsub.s32 0, %v3153
      %v3155 = vrot.slane %v3106, %v3154
      %v3156 = vlaneseq
      %v3157 = vshrl.u32 %v3156, 7
      %v3158 = vsub.s32 0, %v3157
      %v3159 = vrot.slane %v3107, %v3158
      %v3160 = vlaneseq
      %v3161 = vshrl.u32 %v3160, 7
      %v3162 = vsub.s32 0, %v3161
      %v3163 = vrot.slane %v3108, %v3162
      %v3164 = vlaneseq
      %v3165 = vshrl.u32 %v3164, 7
      %v3166 = vsub.s32 0, %v3165
      %v3167 = vrot.slane %v3109, %v3166
      %v3168 = vlaneseq
      %v3169 = vshrl.u32 %v3168, 7
      %v3170 = vsub.s32 0, %v3169
      %v3171 = vrot.slane %v3110, %v3170
      %v3172 = vlaneseq
      %v3173 = vshrl.u32 %v3172, 7
      %v3174 = vsub.s32 0, %v3173
      %v3175 = vrot.slane %v3111, %v3174
      %v3192 = vcombine.low %v3115, %v3119
      %v3193 = vcombine.low %v3123, %v3127
      %v3195 = vunpack.c.l.s4 1983009808
      %v3196 = vunpack.c.0.s8 %v3195
      %v3197 = vlaneseq
      %v3198 = vshrl.u32 %v3197, 7
      %v3199 = vsub.s32 %v3196, %v3198
      %v3200 = vrot.slane %v3192, %v3199
      %v3202 = vunpack.c.l.s4 1983009808
      %v3203 = vunpack.c.0.s8 %v3202
      %v3204 = vlaneseq
      %v3205 = vshrl.u32 %v3204, 7
      %v3206 = vsub.s32 %v3203, %v3205
      %v3207 = vrot.slane %v3193, %v3206
      %v3208 = vcombine.low %v3200, %v3207
      %v3209 = vcombine.low %v3131, %v3135
      %v3210 = vcombine.low %v3139, %v3143
      %v3212 = vunpack.c.l.s4 1983009808
      %v3213 = vunpack.c.0.s8 %v3212
      %v3214 = vlaneseq
      %v3215 = vshrl.u32 %v3214, 7
      %v3216 = vsub.s32 %v3213, %v3215
      %v3217 = vrot.slane %v3209, %v3216
      %v3219 = vunpack.c.l.s4 1983009808
      %v3220 = vunpack.c.0.s8 %v3219
      %v3221 = vlaneseq
      %v3222 = vshrl.u32 %v3221, 7
      %v3223 = vsub.s32 %v3220, %v3222
      %v3224 = vrot.slane %v3210, %v3223
      %v3225 = vcombine.low %v3217, %v3224
      %v3226 = vcombine.low %v3147, %v3151
      %v3227 = vcombine.low %v3155, %v3159
      %v3229 = vunpack.c.l.s4 1983009808
      %v3230 = vunpack.c.0.s8 %v3229
      %v3231 = vlaneseq
      %v3232 = vshrl.u32 %v3231, 7
      %v3233 = vsub.s32 %v3230, %v3232
      %v3234 = vrot.slane %v3226, %v3233
      %v3236 = vunpack.c.l.s4 1983009808
      %v3237 = vunpack.c.0.s8 %v3236
      %v3238 = vlaneseq
      %v3239 = vshrl.u32 %v3238, 7
      %v3240 = vsub.s32 %v3237, %v3239
      %v3241 = vrot.slane %v3227, %v3240
      %v3242 = vcombine.low %v3234, %v3241
      %v3243 = vcombine.low %v3163, %v3167
      %v3244 = vcombine.low %v3171, %v3175
      %v3246 = vunpack.c.l.s4 1983009808
      %v3247 = vunpack.c.0.s8 %v3246
      %v3248 = vlaneseq
      %v3249 = vshrl.u32 %v3248, 7
      %v3250 = vsub.s32 %v3247, %v3249
      %v3251 = vrot.slane %v3243, %v3250
      %v3253 = vunpack.c.l.s4 1983009808
      %v3254 = vunpack.c.0.s8 %v3253
      %v3255 = vlaneseq
      %v3256 = vshrl.u32 %v3255, 7
      %v3257 = vsub.s32 %v3254, %v3256
      %v3258 = vrot.slane %v3244, %v3257
      %v3259 = vcombine.low %v3251, %v3258
      %vm3264 = vcmask 261120
      %3265 = vst.msk [vmem:[%s149] sm:$0xff] %vm3264, %v3208
      %3266 = vst.msk [vmem:[%s149 + $0x8] sm:$0xff] %vm3264, %v3225
      %3267 = vst.msk [vmem:[%s149 + $0x10] sm:$0xff] %vm3264, %v3242
      %3268 = vst.msk [vmem:[%s149 + $0x18] sm:$0xff] %vm3264, %v3259
      %s3269 = smul.u32 4, %s16
      %p3270 = scmp.lt.s32.totalorder %s3269, 31
      %s3271 = scalar_select %p3270, %s3269, 31
      %p3272 = scmp.lt.s32.totalorder %s17, 0
      %s3273 = scalar_select %p3272, %s17, 0
      %s3274 = sadd.s32 %s3273, %s3271
      %s3275 = smul.addr %s3274, 8
      %s3276 = scalar_lea.vmem %s1, %s3275
      // Predicated region
      $region25: #{tpu_custom_call.1} parent=23 // pred_check
        %p3277 = pneg %p72
      $region26: #{tpu_custom_call.1} parent=23 // pred_check_branch
        %3279 = sbr.rel (%p3277) target = $region28
      $region27: #{tpu_custom_call.1} parent=23 // pred_region
        %s3280 = smul.u32 4, %s16
      $region28: #{tpu_custom_call.1} parent=23 // pred_fallthru
        _
    $region24: #{tpu_custom_call.1} parent=5 // pred_fallthru
      _
    %p3281 = scmp.le.s32.totalorder 2, %s7
    // Predicated region
    $region29: #{tpu_custom_call.1} parent=5 // pred_check
      %p3282 = pneg %p3281
    $region30: #{tpu_custom_call.1} parent=5 // pred_check_branch
      %3284 = sbr.rel (%p3282) target = $region32
    $region31: #{tpu_custom_call.1} parent=5 // pred_region
      %s3285 = ssub.s32 %s7, 2
      // Predicated region
      $region33: #{tpu_custom_call.1} parent=31 // pred_check
        %p3286 = pneg %p78
      $region34: #{tpu_custom_call.1} parent=31 // pred_check_branch
        %3288 = sbr.rel (%p3286) target = $region36
      $region35: #{tpu_custom_call.1} parent=31 // pred_region
        %s3289 = smul.u32 4, %s18
        %p3290 = scmp.lt.s32.totalorder %s3289, 31
        %s3291 = scalar_select %p3290, %s3289, 31
        %p3292 = scmp.lt.s32.totalorder %s19, 0
        %s3293 = scalar_select %p3292, %s19, 0
        %s3294 = sadd.s32 %s3293, %s3291
        %s3295 = smul.addr %s3294, 8
        %s3296 = scalar_lea.vmem %s1, %s3295
      $region36: #{tpu_custom_call.1} parent=31 // pred_fallthru
        _
    $region32: #{tpu_custom_call.1} parent=5 // pred_fallthru
      _
  $region6: #{tpu_custom_call.1} parent=0 // loop_footer
    %s11 = sadd.s32 1, %s7
  $region7: #{tpu_custom_call.1} parent=0 // loop_footer_branch
    %6 = sbr.rel target = $region3
  $region8: #{tpu_custom_call.1} parent=0 // loop_exit
    _

</llo_original>
